<compile_context>
chip_gen: v7x
topology: tpu7x:2x2x1
jax: 0.10.0
libtpu: 0.0.40
codegen_flags: <defaults>
</compile_context>

<pallas_src>
import functools

import jax
import jax.numpy as jnp
from jax import lax
from jax.experimental import pallas as pl
from jax.experimental.pallas import tpu as pltpu

EPS = 1e-5
H1, H2 = 64, 32
# dot_general dims for "contract the last dim of both operands" (A @ B^T).
DIMS_T = (((1,), (1,)), ((), ()))


def _round_up(x, m):
    return ((x + m - 1) // m) * m


def init_params(key, input_dim):
    """PyTorch-style init: Linear weight/bias ~ U(+-1/sqrt(fan_in)); BN gamma=1,
    beta=0. Linear weights kept in PyTorch (out_dim, in_dim) layout."""
    ks = jax.random.split(key, 6)

    def lin(kw, kb, fan_in, fan_out):
        bound = 1.0 / (fan_in ** 0.5)
        w = jax.random.uniform(kw, (fan_out, fan_in), jnp.float32, -bound, bound)
        b = jax.random.uniform(kb, (fan_out,), jnp.float32, -bound, bound)
        return w, b

    w1, b1 = lin(ks[0], ks[1], input_dim, H1)
    w2, b2 = lin(ks[2], ks[3], H1, H2)
    w3, b3 = lin(ks[4], ks[5], H2, 1)
    g1, be1 = jnp.ones((H1,), jnp.float32), jnp.zeros((H1,), jnp.float32)
    g2, be2 = jnp.ones((H2,), jnp.float32), jnp.zeros((H2,), jnp.float32)
    return (w1, b1, g1, be1, w2, b2, g2, be2, w3, b3)


def pack_params(params):
    """Pack the 10 parameter tensors into 3 small arrays (all loaded once):
       w1p: (H1, D+1) f32  -- w1 with b1 appended as the trailing column,
       w2p: (H2, H1+1) f32 -- w2 with b2 appended as the trailing column,
       vecp: (8, H1)  f32  -- per-feature rows: g1, be1, g2, be2, w3, b3."""
    (w1, b1, g1, be1, w2, b2, g2, be2, w3, b3) = params
    w1p = jnp.concatenate([w1, b1[:, None]], axis=1)
    w2p = jnp.concatenate([w2, b2[:, None]], axis=1)
    vecp = jnp.zeros((8, H1), jnp.float32)
    vecp = vecp.at[0, :].set(g1)
    vecp = vecp.at[1, :].set(be1)
    vecp = vecp.at[2, 0:H2].set(g2)
    vecp = vecp.at[3, 0:H2].set(be2)
    vecp = vecp.at[4, 0:H2].set(w3[0])
    vecp = vecp.at[5, 0].set(b3[0])
    return w1p, w2p, vecp


def shallow_nn_forward(x, packed, *, block_b=2048, mxu_dtype=jnp.bfloat16,
                       cache_budget_bytes=24 * 2**20):
    """ShallowNN forward pass (training-mode BN). Returns (B, 1) float32."""
    w1p, w2p, vecp = packed
    B, D = x.shape
    assert w1p.shape == (H1, D + 1) and w2p.shape == (H2, H1 + 1)

    # ---- batch tiling: pad to a multiple of 128 lanes, no whole-batch cliff --
    block_b = _round_up(max(block_b, 128), 128)
    tb = min(block_b, _round_up(B, 128))
    assert tb % 128 == 0
    b_pad = _round_up(B, tb)
    n_t = b_pad // tb
    padded = b_pad != B
    inv_b = 1.0 / float(B)                      # true batch size for BN stats

    # ---- wrapper-side prep: ones column (folds b1), batch pad, MXU dtype ----
    xk = jnp.concatenate([x, jnp.ones((B, 1), x.dtype)], axis=1)
    if padded:
        xk = jnp.pad(xk, ((0, b_pad - B), (0, 0)))   # padded rows are all-zero
    xk = xk.astype(mxu_dtype)
    w1k = w1p.astype(mxu_dtype)

    # ---- activation cache: h1/h2 resident in VMEM across the phase axis -----
    itemsize = jnp.dtype(mxu_dtype).itemsize
    cache_bytes = (H1 + H2) * b_pad * itemsize
    use_cache = cache_bytes <= cache_budget_bytes

    # Scoped-VMEM limit: above the 16/32 MiB defaults, below v7x's 64 MiB.
    need = (cache_bytes if use_cache else 0) \
        + 3 * tb * (D + 1) * itemsize + 3 * tb * 4 + (1 << 20)
    vmem_limit = int(min(56 * 2**20, max(32 * 2**20, need + (8 << 20))))

    def kernel(x_ref, w1_ref, w2_ref, vec_ref, o_ref,
               s1_ref, q1_ref, s2_ref, q2_ref,
               w2e_ref, b2e_ref, w3e_ref, b3e_ref, *cache):
        p = pl.program_id(0)        # phase: 0 BN1 stats, 1 BN2 stats, 2 output
        t = pl.program_id(1)        # batch tile
        if use_cache:
            h1c_ref, h2c_ref = cache

        # 0/1 row over this tile's lanes: 1 for real batch rows, 0 for padding.
        # Feeding it to the stat matmuls masks padded rows out of the BN sums.
        if padded:
            lane = lax.broadcasted_iota(jnp.int32, (1, tb), 1)
            ones_row = ((t * tb + lane) < B).astype(jnp.float32)
        else:
            ones_row = jnp.ones((1, tb), jnp.float32)

        def compute_h1():
            # Linear(D, 64) + bias (via ones column) + ReLU, feature-major.
            pre = lax.dot_general(w1_ref[...], x_ref[...], DIMS_T,
                                  preferred_element_type=jnp.float32)
            return jnp.maximum(pre, 0.0)                       # f32 (H1, tb)

        def compute_h2(h1m):
            # BN1-folded Linear(64, 32) + ReLU, feature-major.
            pre = jnp.dot(w2e_ref[...], h1m,
                          preferred_element_type=jnp.float32)
            return jnp.maximum(pre + b2e_ref[...], 0.0)        # f32 (H2, tb)

        @pl.when((p == 0) & (t == 0))
        def _init():
            s1_ref[...] = jnp.zeros_like(s1_ref)
            q1_ref[...] = jnp.zeros_like(q1_ref)
            s2_ref[...] = jnp.zeros_like(s2_ref)
            q2_ref[...] = jnp.zeros_like(q2_ref)

        # ---- phase 0: layer 1, cache h1, accumulate BN1 sums (f32) ----------
        @pl.when(p == 0)
        def _phase0():
            h1 = compute_h1()
            if use_cache:
                h1c_ref[t] = h1.astype(h1c_ref.dtype)
            s1_ref[...] += lax.dot_general(ones_row, h1, DIMS_T,
                                           preferred_element_type=jnp.float32)
            q1_ref[...] += lax.dot_general(ones_row, h1 * h1, DIMS_T,
                                           preferred_element_type=jnp.float32)

        # ---- phase 1 entry: fold BN1 into the layer-2 weight/bias (f32) -----
        @pl.when((p == 1) & (t == 0))
        def _fold1():
            m1 = s1_ref[...] * inv_b                           # (1, H1)
            # Single-pass variance; clamp guards tiny negative rounding. A
            # shifted/Welford accumulation would be tighter for huge B.
            v1 = jnp.maximum(q1_ref[...] * inv_b - m1 * m1, 0.0)
            scale1 = vec_ref[0:1, :] * lax.rsqrt(v1 + EPS)     # gamma1 * rstd1
            shift1 = vec_ref[1:2, :] - m1 * scale1             # beta1 - m1*s1
            w2 = w2_ref[:, 0:H1]                               # (H2, H1) f32
            b2 = w2_ref[:, H1:H1 + 1]                          # (H2, 1)  f32
            w2e_ref[...] = (w2 * scale1).astype(w2e_ref.dtype)
            b2e_ref[...] = jnp.sum(w2 * shift1, axis=1, keepdims=True) + b2

        # ---- phase 1: layer 2, cache h2, accumulate BN2 sums (f32) ----------
        @pl.when(p == 1)
        def _phase1():
            if use_cache:
                h1m = h1c_ref[t]
            else:
                h1m = compute_h1().astype(mxu_dtype)
            h2 = compute_h2(h1m)
            if use_cache:
                h2c_ref[t] = h2.astype(h2c_ref.dtype)
            s2_ref[...] += lax.dot_general(ones_row, h2, DIMS_T,
                                           preferred_element_type=jnp.float32)
            q2_ref[...] += lax.dot_general(ones_row, h2 * h2, DIMS_T,
                                           preferred_element_type=jnp.float32)

        # ---- phase 2 entry: fold BN2 into the final Linear(32, 1) -----------
        @pl.when((p == 2) & (t == 0))
        def _fold2():
            m2 = s2_ref[...] * inv_b                           # (1, H2)
            v2 = jnp.maximum(q2_ref[...] * inv_b - m2 * m2, 0.0)
            scale2 = vec_ref[2:3, 0:H2] * lax.rsqrt(v2 + EPS)
            shift2 = vec_ref[3:4, 0:H2] - m2 * scale2
            w3 = vec_ref[4:5, 0:H2]                            # (1, H2)
            w3e_ref[...] = (w3 * scale2).astype(w3e_ref.dtype)
            b3e_ref[...] = (jnp.sum(w3 * shift2, axis=1, keepdims=True)
                            + vec_ref[5:6, 0:1])

        # ---- phase 2: lane-dense (1, tb) output row --------------------------
        @pl.when(p == 2)
        def _phase2():
            if use_cache:
                h2m = h2c_ref[t]
            else:
                h2m = compute_h2(compute_h1().astype(mxu_dtype)).astype(mxu_dtype)
            out = jnp.dot(w3e_ref[...], h2m,
                          preferred_element_type=jnp.float32)
            o_ref[...] = (out + b3e_ref[...]).astype(o_ref.dtype)

    # x is only consumed in phase 0 when the activation cache is live: freeze
    # its block index for p > 0 so the pipeline stops re-DMAing it.
    if use_cache:
        x_map = lambda p, t: (jnp.where(p == 0, t, 0), 0)
    else:
        x_map = lambda p, t: (t, 0)
    # Output block index frozen for p < 2: phases 0-1 do no output stores and
    # trigger no HBM writeback; each tile is written exactly once in phase 2.
    out_map = lambda p, t: (0, jnp.where(p == 2, t, 0))

    scratch = [
        pltpu.VMEM((1, H1), jnp.float32),    # BN1 sum
        pltpu.VMEM((1, H1), jnp.float32),    # BN1 sum of squares
        pltpu.VMEM((1, H2), jnp.float32),    # BN2 sum
        pltpu.VMEM((1, H2), jnp.float32),    # BN2 sum of squares
        pltpu.VMEM((H2, H1), mxu_dtype),     # BN1-folded layer-2 weight
        pltpu.VMEM((H2, 1), jnp.float32),    # BN1-folded layer-2 bias (column)
        pltpu.VMEM((1, H2), mxu_dtype),      # BN2-folded layer-3 weight row
        pltpu.VMEM((1, 1), jnp.float32),     # BN2-folded layer-3 bias
    ]
    if use_cache:
        scratch += [pltpu.VMEM((n_t, H1, tb), mxu_dtype),   # h1 tiles
                    pltpu.VMEM((n_t, H2, tb), mxu_dtype)]   # h2 tiles

    out_row = pl.pallas_call(
        kernel,
        out_shape=jax.ShapeDtypeStruct((1, b_pad), jnp.float32),
        grid_spec=pltpu.PrefetchScalarGridSpec(
            num_scalar_prefetch=0,
            grid=(3, n_t),
            in_specs=[
                pl.BlockSpec((tb, D + 1), x_map),               # x batch tile
                pl.BlockSpec((H1, D + 1), lambda p, t: (0, 0)),  # w1 | b1
                pl.BlockSpec((H2, H1 + 1), lambda p, t: (0, 0)),  # w2 | b2
                pl.BlockSpec((8, H1), lambda p, t: (0, 0)),      # vec rows
            ],
            out_specs=pl.BlockSpec((1, tb), out_map),
            scratch_shapes=scratch,
        ),
        # Both axes carry state (shared BN accumulators / phase ordering).
        compiler_params=pltpu.CompilerParams(
            dimension_semantics=("arbitrary", "arbitrary"),
            vmem_limit_bytes=vmem_limit),
    )(xk, w1k, w2p, vecp)
    return out_row[0, :B].reshape(B, 1)


def reference_forward(x, params):
    """Pure-JAX reference of the same semantics (training-mode BatchNorm)."""
    (w1, b1, g1, be1, w2, b2, g2, be2, w3, b3) = params
    hp = jax.lax.Precision.HIGHEST
    h = jnp.maximum(jnp.dot(x, w1.T, precision=hp) + b1, 0.0)
    m, v = jnp.mean(h, 0), jnp.var(h, 0)
    h = (h - m) / jnp.sqrt(v + EPS) * g1 + be1
    h = jnp.maximum(jnp.dot(h, w2.T, precision=hp) + b2, 0.0)
    m, v = jnp.mean(h, 0), jnp.var(h, 0)
    h = (h - m) / jnp.sqrt(v + EPS) * g2 + be2
    return jnp.dot(h, w3.T, precision=hp) + b3


if __name__ == "__main__":
    key = jax.random.PRNGKey(0)
    k_p, k_x1, k_x2 = jax.random.split(key, 3)

    input_dim = 16
    params = init_params(k_p, input_dim)
    packed = pack_params(params)

    # 1) tiny batch, f32 MXU path (tight check of the BN-fold semantics).
    x1 = jax.random.normal(k_x1, (8, input_dim), dtype=jnp.float32)
    out1 = jax.block_until_ready(
        shallow_nn_forward(x1, packed, mxu_dtype=jnp.float32))
    ref1 = reference_forward(x1, params)
    assert out1.shape == (8, 1)
    assert jnp.allclose(out1, ref1, atol=5e-3, rtol=5e-3), "f32 mismatch (B=8)"

    # 2) multi-tile + batch padding (B=300 -> 3 tiles of 128) + VMEM cache, f32.
    x2 = jax.random.normal(k_x2, (300, input_dim), dtype=jnp.float32)
    out2 = jax.block_until_ready(
        shallow_nn_forward(x2, packed, block_b=128, mxu_dtype=jnp.float32))
    ref2 = reference_forward(x2, params)
    assert out2.shape == (300, 1)
    assert jnp.allclose(out2, ref2, atol=5e-3, rtol=5e-3), "f32 mismatch (tiled)"

    # 3) default bf16 MXU path (v6e/v7x fast path), cached activations.
    out3 = jax.block_until_ready(shallow_nn_forward(x2, packed, block_b=128))
    assert jnp.allclose(out3, ref2, atol=5e-2, rtol=5e-2), "bf16 mismatch"

    # 4) recompute fallback (activation cache disabled), bf16.
    out4 = jax.block_until_ready(
        shallow_nn_forward(x2, packed, block_b=128, cache_budget_bytes=0))
    assert jnp.allclose(out4, ref2, atol=5e-2, rtol=5e-2), "bf16 mismatch (no cache)"

    print("KERNEL_OK")
</pallas_src>

<mosaic_0001>
module attributes {stable_mosaic.version = 11 : i64} {
  func.func @kernel(%arg0: i32, %arg1: i32, %arg2: memref<128x17xf32, #tpu.memory_space<vmem>>, %arg3: memref<64x17xf32, #tpu.memory_space<vmem>>, %arg4: memref<32x65xf32, #tpu.memory_space<vmem>>, %arg5: memref<8x64xf32, #tpu.memory_space<vmem>>, %arg6: memref<1x128xf32, #tpu.memory_space<vmem>>, %arg7: memref<1x64xf32, #tpu.memory_space<vmem>>, %arg8: memref<1x64xf32, #tpu.memory_space<vmem>>, %arg9: memref<1x32xf32, #tpu.memory_space<vmem>>, %arg10: memref<1x32xf32, #tpu.memory_space<vmem>>, %arg11: memref<32x64xf32, #tpu.memory_space<vmem>>, %arg12: memref<32x1xf32, #tpu.memory_space<vmem>>, %arg13: memref<1x32xf32, #tpu.memory_space<vmem>>, %arg14: memref<1x1xf32, #tpu.memory_space<vmem>>, %arg15: memref<1x64x128xf32, #tpu.memory_space<vmem>>, %arg16: memref<1x32x128xf32, #tpu.memory_space<vmem>>) attributes {dimension_semantics = [#tpu.dimension_semantics<arbitrary>, #tpu.dimension_semantics<arbitrary>], iteration_bounds = array<i64: 3, 1>, scalar_prefetch = 0 : i64, scratch_operands = 10 : i64, tpu.core_type = #tpu.core_type<tc>, window_params = [{transform_indices = @transform_0, window_bounds = array<i64: 128, 17>}, {pipeline_mode = #tpu.pipeline_mode<synchronous>, transform_indices = @transform_1, window_bounds = array<i64: 64, 17>}, {pipeline_mode = #tpu.pipeline_mode<synchronous>, transform_indices = @transform_2, window_bounds = array<i64: 32, 65>}, {pipeline_mode = #tpu.pipeline_mode<synchronous>, transform_indices = @transform_3, window_bounds = array<i64: 8, 64>}, {transform_indices = @transform_4, window_bounds = array<i64: 1, 128>}]} {
    %0 = tpu.iota {dimensions = array<i32: 1>} : vector<1x128xi32>
    %c128_i32 = arith.constant 128 : i32
    %1 = arith.muli %arg1, %c128_i32 : i32
    %2 = vector.broadcast %1 : i32 to vector<1x128xi32>
    %3 = arith.addi %2, %0 : vector<1x128xi32>
    %c8_i32 = arith.constant 8 : i32
    %4 = vector.broadcast %c8_i32 : i32 to vector<1x128xi32>
    %5 = arith.cmpi slt, %3, %4 : vector<1x128xi32>
    %6 = arith.extui %5 : vector<1x128xi1> to vector<1x128xi32>
    %7 = arith.sitofp %6 : vector<1x128xi32> to vector<1x128xf32>
    %c0_i32 = arith.constant 0 : i32
    %8 = arith.cmpi eq, %arg0, %c0_i32 : i32
    %c0_i32_0 = arith.constant 0 : i32
    %9 = arith.cmpi eq, %arg1, %c0_i32_0 : i32
    %10 = arith.andi %8, %9 : i1
    %11 = arith.extui %10 : i1 to i32
    %c0_i32_1 = arith.constant 0 : i32
    %12 = arith.cmpi ne, %11, %c0_i32_1 : i32
    scf.if %12 {
      %cst = arith.constant 0.000000e+00 : f32
      %32 = vector.broadcast %cst : f32 to vector<1x64xf32>
      %c0 = arith.constant 0 : index
      %c0_12 = arith.constant 0 : index
      %33 = vector.load %arg7[%c0, %c0_12] : memref<1x64xf32, #tpu.memory_space<vmem>>, vector<1x64xf32>
      tpu.vector_store %arg7[%c0, %c0_12], %32 {strides = array<i32>} : memref<1x64xf32, #tpu.memory_space<vmem>>, vector<1x64xf32>,
      %cst_13 = arith.constant 0.000000e+00 : f32
      %34 = vector.broadcast %cst_13 : f32 to vector<1x64xf32>
      %c0_14 = arith.constant 0 : index
      %c0_15 = arith.constant 0 : index
      %35 = vector.load %arg8[%c0_14, %c0_15] : memref<1x64xf32, #tpu.memory_space<vmem>>, vector<1x64xf32>
      tpu.vector_store %arg8[%c0_14, %c0_15], %34 {strides = array<i32>} : memref<1x64xf32, #tpu.memory_space<vmem>>, vector<1x64xf32>,
      %cst_16 = arith.constant 0.000000e+00 : f32
      %36 = vector.broadcast %cst_16 : f32 to vector<1x32xf32>
      %c0_17 = arith.constant 0 : index
      %c0_18 = arith.constant 0 : index
      %37 = vector.load %arg9[%c0_17, %c0_18] : memref<1x32xf32, #tpu.memory_space<vmem>>, vector<1x32xf32>
      tpu.vector_store %arg9[%c0_17, %c0_18], %36 {strides = array<i32>} : memref<1x32xf32, #tpu.memory_space<vmem>>, vector<1x32xf32>,
      %cst_19 = arith.constant 0.000000e+00 : f32
      %38 = vector.broadcast %cst_19 : f32 to vector<1x32xf32>
      %c0_20 = arith.constant 0 : index
      %c0_21 = arith.constant 0 : index
      %39 = vector.load %arg10[%c0_20, %c0_21] : memref<1x32xf32, #tpu.memory_space<vmem>>, vector<1x32xf32>
      tpu.vector_store %arg10[%c0_20, %c0_21], %38 {strides = array<i32>} : memref<1x32xf32, #tpu.memory_space<vmem>>, vector<1x32xf32>,
    } else {
    }
    %c0_i32_2 = arith.constant 0 : i32
    %13 = arith.cmpi eq, %arg0, %c0_i32_2 : i32
    %14 = arith.extui %13 : i1 to i32
    %c0_i32_3 = arith.constant 0 : i32
    %15 = arith.cmpi ne, %14, %c0_i32_3 : i32
    scf.if %15 {
      %c0 = arith.constant 0 : index
      %c0_12 = arith.constant 0 : index
      %32 = vector.load %arg3[%c0, %c0_12] : memref<64x17xf32, #tpu.memory_space<vmem>>, vector<64x17xf32>
      %c0_13 = arith.constant 0 : index
      %c0_14 = arith.constant 0 : index
      %33 = vector.load %arg2[%c0_13, %c0_14] : memref<128x17xf32, #tpu.memory_space<vmem>>, vector<128x17xf32>
      %cst = arith.constant dense<0.000000e+00> : vector<64x128xf32>
      %34 = tpu.matmul %32, %33, %cst {dimension_numbers = #tpu.dot_dimension_numbers<[1], [1], [0], [0], [0, 0, 1, 0], [], []>} : vector<64x17xf32>, vector<128x17xf32>, vector<64x128xf32> -> vector<64x128xf32>
      %cst_15 = arith.constant 0.000000e+00 : f32
      %35 = vector.broadcast %cst_15 : f32 to vector<64x128xf32>
      %36 = arith.maximumf %34, %35 : vector<64x128xf32>
      %37 = arith.index_cast %arg1 : i32 to index
      %c0_16 = arith.constant 0 : index
      %c0_17 = arith.constant 0 : index
      %38 = vector.load %arg15[%37, %c0_16, %c0_17] : memref<1x64x128xf32, #tpu.memory_space<vmem>>, vector<1x64x128xf32>
      %39 = vector.shape_cast %38 : vector<1x64x128xf32> to vector<64x128xf32>
      %40 = vector.shape_cast %36 : vector<64x128xf32> to vector<1x64x128xf32>
      tpu.vector_store %arg15[%37, %c0_16, %c0_17], %40 {strides = array<i32>} : memref<1x64x128xf32, #tpu.memory_space<vmem>>, vector<1x64x128xf32>,
      %c0_18 = arith.constant 0 : index
      %c0_19 = arith.constant 0 : index
      %41 = vector.load %arg7[%c0_18, %c0_19] : memref<1x64xf32, #tpu.memory_space<vmem>>, vector<1x64xf32>
      %cst_20 = arith.constant dense<0.000000e+00> : vector<1x64xf32>
      %42 = tpu.matmul %7, %36, %cst_20 {dimension_numbers = #tpu.dot_dimension_numbers<[1], [1], [0], [0], [0, 0, 1, 0], [], []>} : vector<1x128xf32>, vector<64x128xf32>, vector<1x64xf32> -> vector<1x64xf32>
      %43 = arith.addf %41, %42 : vector<1x64xf32>
      %c0_21 = arith.constant 0 : index
      %c0_22 = arith.constant 0 : index
      %44 = vector.load %arg7[%c0_21, %c0_22] : memref<1x64xf32, #tpu.memory_space<vmem>>, vector<1x64xf32>
      tpu.vector_store %arg7[%c0_21, %c0_22], %43 {strides = array<i32>} : memref<1x64xf32, #tpu.memory_space<vmem>>, vector<1x64xf32>,
      %c0_23 = arith.constant 0 : index
      %c0_24 = arith.constant 0 : index
      %45 = vector.load %arg8[%c0_23, %c0_24] : memref<1x64xf32, #tpu.memory_space<vmem>>, vector<1x64xf32>
      %46 = arith.mulf %36, %36 : vector<64x128xf32>
      %cst_25 = arith.constant dense<0.000000e+00> : vector<1x64xf32>
      %47 = tpu.matmul %7, %46, %cst_25 {dimension_numbers = #tpu.dot_dimension_numbers<[1], [1], [0], [0], [0, 0, 1, 0], [], []>} : vector<1x128xf32>, vector<64x128xf32>, vector<1x64xf32> -> vector<1x64xf32>
      %48 = arith.addf %45, %47 : vector<1x64xf32>
      %c0_26 = arith.constant 0 : index
      %c0_27 = arith.constant 0 : index
      %49 = vector.load %arg8[%c0_26, %c0_27] : memref<1x64xf32, #tpu.memory_space<vmem>>, vector<1x64xf32>
      tpu.vector_store %arg8[%c0_26, %c0_27], %48 {strides = array<i32>} : memref<1x64xf32, #tpu.memory_space<vmem>>, vector<1x64xf32>,
    } else {
    }
    %c1_i32 = arith.constant 1 : i32
    %16 = arith.cmpi eq, %arg0, %c1_i32 : i32
    %c0_i32_4 = arith.constant 0 : i32
    %17 = arith.cmpi eq, %arg1, %c0_i32_4 : i32
    %18 = arith.andi %16, %17 : i1
    %19 = arith.extui %18 : i1 to i32
    %c0_i32_5 = arith.constant 0 : i32
    %20 = arith.cmpi ne, %19, %c0_i32_5 : i32
    scf.if %20 {
      %c0 = arith.constant 0 : index
      %c0_12 = arith.constant 0 : index
      %32 = vector.load %arg7[%c0, %c0_12] : memref<1x64xf32, #tpu.memory_space<vmem>>, vector<1x64xf32>
      %cst = arith.constant 1.250000e-01 : f32
      %33 = vector.broadcast %cst : f32 to vector<1x64xf32>
      %34 = arith.mulf %32, %33 : vector<1x64xf32>
      %c0_13 = arith.constant 0 : index
      %c0_14 = arith.constant 0 : index
      %35 = vector.load %arg8[%c0_13, %c0_14] : memref<1x64xf32, #tpu.memory_space<vmem>>, vector<1x64xf32>
      %cst_15 = arith.constant 1.250000e-01 : f32
      %36 = vector.broadcast %cst_15 : f32 to vector<1x64xf32>
      %37 = arith.mulf %35, %36 : vector<1x64xf32>
      %38 = arith.mulf %34, %34 : vector<1x64xf32>
      %39 = arith.subf %37, %38 : vector<1x64xf32>
      %cst_16 = arith.constant 0.000000e+00 : f32
      %40 = vector.broadcast %cst_16 : f32 to vector<1x64xf32>
      %41 = arith.maximumf %39, %40 : vector<1x64xf32>
      %c0_17 = arith.constant 0 : index
      %c0_18 = arith.constant 0 : index
      %42 = vector.load %arg5[%c0_17, %c0_18] : memref<8x64xf32, #tpu.memory_space<vmem>>, vector<1x64xf32>
      %cst_19 = arith.constant 9.99999974E-6 : f32
      %43 = vector.broadcast %cst_19 : f32 to vector<1x64xf32>
      %44 = arith.addf %41, %43 : vector<1x64xf32>
      %45 = math.rsqrt %44 : vector<1x64xf32>
      %46 = arith.mulf %42, %45 : vector<1x64xf32>
      %c1 = arith.constant 1 : index
      %c0_20 = arith.constant 0 : index
      %47 = vector.load %arg5[%c1, %c0_20] : memref<8x64xf32, #tpu.memory_space<vmem>>, vector<1x64xf32>
      %48 = arith.mulf %34, %46 : vector<1x64xf32>
      %49 = arith.subf %47, %48 : vector<1x64xf32>
      %c0_21 = arith.constant 0 : index
      %c0_22 = arith.constant 0 : index
      %50 = vector.load %arg4[%c0_21, %c0_22] : memref<32x65xf32, #tpu.memory_space<vmem>>, vector<32x64xf32>
      %c0_23 = arith.constant 0 : index
      %c64 = arith.constant 64 : index
      %51 = vector.load %arg4[%c0_23, %c64] : memref<32x65xf32, #tpu.memory_space<vmem>>, vector<32x1xf32>
      %52 = vector.broadcast %46 : vector<1x64xf32> to vector<32x64xf32>
      %53 = arith.mulf %50, %52 : vector<32x64xf32>
      %c0_24 = arith.constant 0 : index
      %c0_25 = arith.constant 0 : index
      %54 = vector.load %arg11[%c0_24, %c0_25] : memref<32x64xf32, #tpu.memory_space<vmem>>, vector<32x64xf32>
      tpu.vector_store %arg11[%c0_24, %c0_25], %53 {strides = array<i32>} : memref<32x64xf32, #tpu.memory_space<vmem>>, vector<32x64xf32>,
      %55 = vector.broadcast %49 : vector<1x64xf32> to vector<32x64xf32>
      %56 = arith.mulf %50, %55 : vector<32x64xf32>
      %cst_26 = arith.constant dense<0.000000e+00> : vector<32xf32>
      %57 = vector.multi_reduction <add>, %56, %cst_26 [1] : vector<32x64xf32> to vector<32xf32>
      %58 = vector.shape_cast %57 : vector<32xf32> to vector<32x1xf32>
      %59 = arith.addf %58, %51 : vector<32x1xf32>
      %c0_27 = arith.constant 0 : index
      %c0_28 = arith.constant 0 : index
      %60 = vector.load %arg12[%c0_27, %c0_28] : memref<32x1xf32, #tpu.memory_space<vmem>>, vector<32x1xf32>
      tpu.vector_store %arg12[%c0_27, %c0_28], %59 {strides = array<i32>} : memref<32x1xf32, #tpu.memory_space<vmem>>, vector<32x1xf32>,
    } else {
    }
    %c1_i32_6 = arith.constant 1 : i32
    %21 = arith.cmpi eq, %arg0, %c1_i32_6 : i32
    %22 = arith.extui %21 : i1 to i32
    %c0_i32_7 = arith.constant 0 : i32
    %23 = arith.cmpi ne, %22, %c0_i32_7 : i32
    scf.if %23 {
      %32 = arith.index_cast %arg1 : i32 to index
      %c0 = arith.constant 0 : index
      %c0_12 = arith.constant 0 : index
      %33 = vector.load %arg15[%32, %c0, %c0_12] : memref<1x64x128xf32, #tpu.memory_space<vmem>>, vector<1x64x128xf32>
      %34 = vector.shape_cast %33 : vector<1x64x128xf32> to vector<64x128xf32>
      %c0_13 = arith.constant 0 : index
      %c0_14 = arith.constant 0 : index
      %35 = vector.load %arg11[%c0_13, %c0_14] : memref<32x64xf32, #tpu.memory_space<vmem>>, vector<32x64xf32>
      %cst = arith.constant dense<0.000000e+00> : vector<32x128xf32>
      %36 = tpu.matmul %35, %34, %cst {dimension_numbers = #tpu.dot_dimension_numbers<[1], [0], [0], [1], [0, 0, 1, 1], [], []>} : vector<32x64xf32>, vector<64x128xf32>, vector<32x128xf32> -> vector<32x128xf32>
      %c0_15 = arith.constant 0 : index
      %c0_16 = arith.constant 0 : index
      %37 = vector.load %arg12[%c0_15, %c0_16] : memref<32x1xf32, #tpu.memory_space<vmem>>, vector<32x1xf32>
      %38 = vector.broadcast %37 : vector<32x1xf32> to vector<32x128xf32>
      %39 = arith.addf %36, %38 : vector<32x128xf32>
      %cst_17 = arith.constant 0.000000e+00 : f32
      %40 = vector.broadcast %cst_17 : f32 to vector<32x128xf32>
      %41 = arith.maximumf %39, %40 : vector<32x128xf32>
      %42 = arith.index_cast %arg1 : i32 to index
      %c0_18 = arith.constant 0 : index
      %c0_19 = arith.constant 0 : index
      %43 = vector.load %arg16[%42, %c0_18, %c0_19] : memref<1x32x128xf32, #tpu.memory_space<vmem>>, vector<1x32x128xf32>
      %44 = vector.shape_cast %43 : vector<1x32x128xf32> to vector<32x128xf32>
      %45 = vector.shape_cast %41 : vector<32x128xf32> to vector<1x32x128xf32>
      tpu.vector_store %arg16[%42, %c0_18, %c0_19], %45 {strides = array<i32>} : memref<1x32x128xf32, #tpu.memory_space<vmem>>, vector<1x32x128xf32>,
      %c0_20 = arith.constant 0 : index
      %c0_21 = arith.constant 0 : index
      %46 = vector.load %arg9[%c0_20, %c0_21] : memref<1x32xf32, #tpu.memory_space<vmem>>, vector<1x32xf32>
      %cst_22 = arith.constant dense<0.000000e+00> : vector<1x32xf32>
      %47 = tpu.matmul %7, %41, %cst_22 {dimension_numbers = #tpu.dot_dimension_numbers<[1], [1], [0], [0], [0, 0, 1, 0], [], []>} : vector<1x128xf32>, vector<32x128xf32>, vector<1x32xf32> -> vector<1x32xf32>
      %48 = arith.addf %46, %47 : vector<1x32xf32>
      %c0_23 = arith.constant 0 : index
      %c0_24 = arith.constant 0 : index
      %49 = vector.load %arg9[%c0_23, %c0_24] : memref<1x32xf32, #tpu.memory_space<vmem>>, vector<1x32xf32>
      tpu.vector_store %arg9[%c0_23, %c0_24], %48 {strides = array<i32>} : memref<1x32xf32, #tpu.memory_space<vmem>>, vector<1x32xf32>,
      %c0_25 = arith.constant 0 : index
      %c0_26 = arith.constant 0 : index
      %50 = vector.load %arg10[%c0_25, %c0_26] : memref<1x32xf32, #tpu.memory_space<vmem>>, vector<1x32xf32>
      %51 = arith.mulf %41, %41 : vector<32x128xf32>
      %cst_27 = arith.constant dense<0.000000e+00> : vector<1x32xf32>
      %52 = tpu.matmul %7, %51, %cst_27 {dimension_numbers = #tpu.dot_dimension_numbers<[1], [1], [0], [0], [0, 0, 1, 0], [], []>} : vector<1x128xf32>, vector<32x128xf32>, vector<1x32xf32> -> vector<1x32xf32>
      %53 = arith.addf %50, %52 : vector<1x32xf32>
      %c0_28 = arith.constant 0 : index
      %c0_29 = arith.constant 0 : index
      %54 = vector.load %arg10[%c0_28, %c0_29] : memref<1x32xf32, #tpu.memory_space<vmem>>, vector<1x32xf32>
      tpu.vector_store %arg10[%c0_28, %c0_29], %53 {strides = array<i32>} : memref<1x32xf32, #tpu.memory_space<vmem>>, vector<1x32xf32>,
    } else {
    }
    %c2_i32 = arith.constant 2 : i32
    %24 = arith.cmpi eq, %arg0, %c2_i32 : i32
    %c0_i32_8 = arith.constant 0 : i32
    %25 = arith.cmpi eq, %arg1, %c0_i32_8 : i32
    %26 = arith.andi %24, %25 : i1
    %27 = arith.extui %26 : i1 to i32
    %c0_i32_9 = arith.constant 0 : i32
    %28 = arith.cmpi ne, %27, %c0_i32_9 : i32
    scf.if %28 {
      %c0 = arith.constant 0 : index
      %c0_12 = arith.constant 0 : index
      %32 = vector.load %arg9[%c0, %c0_12] : memref<1x32xf32, #tpu.memory_space<vmem>>, vector<1x32xf32>
      %cst = arith.constant 1.250000e-01 : f32
      %33 = vector.broadcast %cst : f32 to vector<1x32xf32>
      %34 = arith.mulf %32, %33 : vector<1x32xf32>
      %c0_13 = arith.constant 0 : index
      %c0_14 = arith.constant 0 : index
      %35 = vector.load %arg10[%c0_13, %c0_14] : memref<1x32xf32, #tpu.memory_space<vmem>>, vector<1x32xf32>
      %cst_15 = arith.constant 1.250000e-01 : f32
      %36 = vector.broadcast %cst_15 : f32 to vector<1x32xf32>
      %37 = arith.mulf %35, %36 : vector<1x32xf32>
      %38 = arith.mulf %34, %34 : vector<1x32xf32>
      %39 = arith.subf %37, %38 : vector<1x32xf32>
      %cst_16 = arith.constant 0.000000e+00 : f32
      %40 = vector.broadcast %cst_16 : f32 to vector<1x32xf32>
      %41 = arith.maximumf %39, %40 : vector<1x32xf32>
      %c2 = arith.constant 2 : index
      %c0_17 = arith.constant 0 : index
      %42 = vector.load %arg5[%c2, %c0_17] : memref<8x64xf32, #tpu.memory_space<vmem>>, vector<1x32xf32>
      %cst_18 = arith.constant 9.99999974E-6 : f32
      %43 = vector.broadcast %cst_18 : f32 to vector<1x32xf32>
      %44 = arith.addf %41, %43 : vector<1x32xf32>
      %45 = math.rsqrt %44 : vector<1x32xf32>
      %46 = arith.mulf %42, %45 : vector<1x32xf32>
      %c3 = arith.constant 3 : index
      %c0_19 = arith.constant 0 : index
      %47 = vector.load %arg5[%c3, %c0_19] : memref<8x64xf32, #tpu.memory_space<vmem>>, vector<1x32xf32>
      %48 = arith.mulf %34, %46 : vector<1x32xf32>
      %49 = arith.subf %47, %48 : vector<1x32xf32>
      %c4 = arith.constant 4 : index
      %c0_20 = arith.constant 0 : index
      %50 = vector.load %arg5[%c4, %c0_20] : memref<8x64xf32, #tpu.memory_space<vmem>>, vector<1x32xf32>
      %51 = arith.mulf %50, %46 : vector<1x32xf32>
      %c0_21 = arith.constant 0 : index
      %c0_22 = arith.constant 0 : index
      %52 = vector.load %arg13[%c0_21, %c0_22] : memref<1x32xf32, #tpu.memory_space<vmem>>, vector<1x32xf32>
      tpu.vector_store %arg13[%c0_21, %c0_22], %51 {strides = array<i32>} : memref<1x32xf32, #tpu.memory_space<vmem>>, vector<1x32xf32>,
      %53 = arith.mulf %50, %49 : vector<1x32xf32>
      %cst_23 = arith.constant dense<0.000000e+00> : vector<1xf32>
      %54 = vector.multi_reduction <add>, %53, %cst_23 [1] : vector<1x32xf32> to vector<1xf32>
      %55 = vector.shape_cast %54 : vector<1xf32> to vector<1x1xf32>
      %c5 = arith.constant 5 : index
      %c0_24 = arith.constant 0 : index
      %56 = vector.load %arg5[%c5, %c0_24] : memref<8x64xf32, #tpu.memory_space<vmem>>, vector<1x1xf32>
      %57 = arith.addf %55, %56 : vector<1x1xf32>
      %c0_25 = arith.constant 0 : index
      %c0_26 = arith.constant 0 : index
      %58 = vector.load %arg14[%c0_25, %c0_26] : memref<1x1xf32, #tpu.memory_space<vmem>>, vector<1x1xf32>
      tpu.vector_store %arg14[%c0_25, %c0_26], %57 {strides = array<i32>} : memref<1x1xf32, #tpu.memory_space<vmem>>, vector<1x1xf32>,
    } else {
    }
    %c2_i32_10 = arith.constant 2 : i32
    %29 = arith.cmpi eq, %arg0, %c2_i32_10 : i32
    %30 = arith.extui %29 : i1 to i32
    %c0_i32_11 = arith.constant 0 : i32
    %31 = arith.cmpi ne, %30, %c0_i32_11 : i32
    scf.if %31 {
      %32 = arith.index_cast %arg1 : i32 to index
      %c0 = arith.constant 0 : index
      %c0_12 = arith.constant 0 : index
      %33 = vector.load %arg16[%32, %c0, %c0_12] : memref<1x32x128xf32, #tpu.memory_space<vmem>>, vector<1x32x128xf32>
      %34 = vector.shape_cast %33 : vector<1x32x128xf32> to vector<32x128xf32>
      %c0_13 = arith.constant 0 : index
      %c0_14 = arith.constant 0 : index
      %35 = vector.load %arg13[%c0_13, %c0_14] : memref<1x32xf32, #tpu.memory_space<vmem>>, vector<1x32xf32>
      %cst = arith.constant dense<0.000000e+00> : vector<1x128xf32>
      %36 = tpu.matmul %35, %34, %cst {dimension_numbers = #tpu.dot_dimension_numbers<[1], [0], [0], [1], [0, 0, 1, 1], [], []>} : vector<1x32xf32>, vector<32x128xf32>, vector<1x128xf32> -> vector<1x128xf32>
      %c0_15 = arith.constant 0 : index
      %c0_16 = arith.constant 0 : index
      %37 = vector.load %arg14[%c0_15, %c0_16] : memref<1x1xf32, #tpu.memory_space<vmem>>, vector<1x1xf32>
      %38 = vector.broadcast %37 : vector<1x1xf32> to vector<1x128xf32>
      %39 = arith.addf %36, %38 : vector<1x128xf32>
      %c0_17 = arith.constant 0 : index
      %c0_18 = arith.constant 0 : index
      %40 = vector.load %arg6[%c0_17, %c0_18] : memref<1x128xf32, #tpu.memory_space<vmem>>, vector<1x128xf32>
      tpu.vector_store %arg6[%c0_17, %c0_18], %39 {strides = array<i32>} : memref<1x128xf32, #tpu.memory_space<vmem>>, vector<1x128xf32>,
    } else {
    }
    return
  }
  func.func @transform_0(%arg0: i32, %arg1: i32) -> (i32, i32) {
    %c0_i32 = arith.constant 0 : i32
    %0 = arith.cmpi eq, %arg0, %c0_i32 : i32
    %c0_i32_0 = arith.constant 0 : i32
    %1 = arith.select %0, %arg1, %c0_i32_0 : i32
    %c0_i32_1 = arith.constant 0 : i32
    %c0_i32_2 = arith.constant 0 : i32
    return %1, %c0_i32_1 : i32, i32
  }
  func.func @transform_1(%arg0: i32, %arg1: i32) -> (i32, i32) {
    %c0_i32 = arith.constant 0 : i32
    %c0_i32_0 = arith.constant 0 : i32
    %c0_i32_1 = arith.constant 0 : i32
    return %c0_i32, %c0_i32_0 : i32, i32
  }
  func.func @transform_2(%arg0: i32, %arg1: i32) -> (i32, i32) {
    %c0_i32 = arith.constant 0 : i32
    %c0_i32_0 = arith.constant 0 : i32
    %c0_i32_1 = arith.constant 0 : i32
    return %c0_i32, %c0_i32_0 : i32, i32
  }
  func.func @transform_3(%arg0: i32, %arg1: i32) -> (i32, i32) {
    %c0_i32 = arith.constant 0 : i32
    %c0_i32_0 = arith.constant 0 : i32
    %c0_i32_1 = arith.constant 0 : i32
    return %c0_i32, %c0_i32_0 : i32, i32
  }
  func.func @transform_4(%arg0: i32, %arg1: i32) -> (i32, i32) {
    %c2_i32 = arith.constant 2 : i32
    %0 = arith.cmpi eq, %arg0, %c2_i32 : i32
    %c0_i32 = arith.constant 0 : i32
    %1 = arith.select %0, %arg1, %c0_i32 : i32
    %c0_i32_0 = arith.constant 0 : i32
    %c0_i32_1 = arith.constant 0 : i32
    return %c0_i32_0, %1 : i32, i32
  }
}

</mosaic_0001>

<llo_original>
// kernel: tpu_custom_call.1
$region0: #{tpu_custom_call.1}
  #allocation0 [shape = 'u32[]', space=smem, size = 0x4, offset = 0x4, fixed_abs, tag = 'smem constant byte address 0x4 - core index']
  #allocation1 [shape = 'u32[144,128]{1,0:T(1,128)}', space=vmem, size = 0x12000, scoped, tag = 'internal scratch']
  #allocation2 [shape = 'f32[1,64]{1,0:T(1,128)}', space=vmem, size = 0x200, scoped, tag = 'scratch operand']
  #allocation3 [shape = 'f32[1,64]{1,0:T(1,128)}', space=vmem, size = 0x200, scoped, tag = 'scratch operand']
  #allocation4 [shape = 'f32[1,32]{1,0:T(1,128)}', space=vmem, size = 0x200, scoped, tag = 'scratch operand']
  #allocation5 [shape = 'f32[1,32]{1,0:T(1,128)}', space=vmem, size = 0x200, scoped, tag = 'scratch operand']
  #allocation6 [shape = 'f32[32,64]{1,0:T(8,128)}', space=vmem, size = 0x4000, scoped, tag = 'scratch operand']
  #allocation7 [shape = 'f32[32,1]{1,0:T(8,128)}', space=vmem, size = 0x4000, scoped, tag = 'scratch operand']
  #allocation8 [shape = 'f32[1,32]{1,0:T(1,128)}', space=vmem, size = 0x200, scoped, tag = 'scratch operand']
  #allocation9 [shape = 'f32[1,1]{1,0:T(1,128)}', space=vmem, size = 0x200, scoped, tag = 'scratch operand']
  #allocation10 [shape = 'f32[1,64,128]{2,1,0:T(8,128)}', space=vmem, size = 0x8000, scoped, tag = 'scratch operand']
  #allocation11 [shape = 'f32[1,32,128]{2,1,0:T(8,128)}', space=vmem, size = 0x4000, scoped, tag = 'scratch operand']
  %s0 = inlined_call_operand.vmem [shape: f32[128,17], index: 0, kind: input, shape index: {}]
  %s1 = inlined_call_operand.vmem [shape: f32[64,17], index: 1, kind: input, shape index: {}]
  %s2 = inlined_call_operand.vmem [shape: f32[32,65], index: 2, kind: input, shape index: {}]
  %s3 = inlined_call_operand.vmem [shape: f32[8,64], index: 3, kind: input, shape index: {}]
  %s4 = inlined_call_operand.hbm [shape: f32[1,128], index: 4, kind: output, shape index: {}]
  %s5 = sld [smem:[#allocation0]]
  $region73: #{tpu_custom_call.1} parent=0
    _
  %s7 = ssub.s32 1, %s5
  %s8 = scalar_select 0, %s7, %s5
  $region1: #{tpu_custom_call.1} parent=0
    #allocation12 [shape = 'u8[1024]{0}', space=vmem, size = 0x400, scoped, tag = 'output window, operand 0']
    #allocation13 [shape = 's32[2]{0}', space=sflag, size = 0x8, scoped, tag = 'scoped memory for tpu_custom_call.1']
    %9 = vsyncpa [#allocation13], 0
    %s10 = scalar_lea.sflag [#allocation13], 1
    %11 = vsyncpa %s10, 0
    loop: start=0, step=1, limit=5
    $region2: #{tpu_custom_call.1} parent=1 // loop_pre_header
      _
    $region3: #{tpu_custom_call.1} parent=1 // loop_header
      %s13 = sphi 0, %s17
      %p14 = scmp.ge.s32.totalorder %s13, 5
      %s20 = sphi 0, %s32
      %s21 = sphi 0, %s28
      %s22 = sphi 0, %s20
      %s23 = sphi 0, %s21
      %s24 = sphi 0, %s22
      %s25 = sphi 0, %s23
      %s39 = sphi 0, %s41
      %s42 = sphi 0, %s39
      %s43 = sphi 0, %s42
      %s59 = sphi 0, %s43
      %s63 = sphi 0, %s63
      %s65 = sphi 0, %s63
      %s66 = sphi 0, %s65
      %s80 = sphi 0, %s66
      %s84 = sphi 0, %s84
      %s86 = sphi 0, %s84
      %s87 = sphi 0, %s86
      %s101 = sphi 0, %s87
      %s105 = sphi 0, %s105
      %s107 = sphi 0, %s105
      %s108 = sphi 0, %s107
      %s122 = sphi 0, %s108
      %s132 = sphi 0, %s134
      %s135 = sphi 0, %s132
      %s136 = sphi 0, %s135
      %s152 = sphi 0, %s136
    $region4: #{tpu_custom_call.1} parent=1 // loop_header_branch
      %16 = sbr.rel (%p14) target = $region8
    $region5: #{tpu_custom_call.1} parent=1 // loop_body
      %s18 = ssub.s32 %s13, 1
      %s19 = ssub.s32 %s13, 2
      %s26 = sadd.s32 1, %s21
      %p27 = scmp.ge.s32.totalorder %s26, 1
      %s28 = scalar_select %p27, 0, %s26
      %s29 = sadd.s32 1, %s20
      %s30 = scalar_select %p27, %s29, %s20
      %p31 = scmp.ge.s32.totalorder %s30, 3
      %s32 = scalar_select %p31, 0, %s30
      %p33 = scmp.eq.s32.totalorder %s20, 0
      %s34 = scalar_select %p33, %s21, 0
      %p35 = scmp.eq.s32.totalorder %s32, 0
      %s36 = scalar_select %p35, %s28, 0
      %s37 = ssub.s32 %s34, %s36
      %p38 = scmp.eq.s32.totalorder %s37, 0
      %s40 = sadd.s32 %s39, 1
      %s41 = scalar_select %p38, %s39, %s40
      %p44 = pneg %p38
      %p45 = scmp.eq.s32.totalorder %s13, 2
      %p46 = por %p44, %p45
      %p47 = scmp.ne.s32.totalorder %s39, %s42
      %p48 = scmp.eq.s32.totalorder %s13, 0
      %p49 = por %p47, %p48
      %p50 = scmp.ne.s32.totalorder %s39, %s42
      %p51 = scmp.eq.s32.totalorder %s18, 2
      %p52 = por %p50, %p51
      %p53 = scmp.ne.s32.totalorder %s42, %s43
      %p54 = scmp.eq.s32.totalorder %s18, 0
      %p55 = por %p53, %p54
      %p56 = scmp.ne.s32.totalorder %s42, %s43
      %p57 = scmp.eq.s32.totalorder %s19, 2
      %p58 = por %p56, %p57
      %p60 = scmp.ne.s32.totalorder %s43, %s59
      %p61 = scmp.eq.s32.totalorder %s19, 0
      %p62 = por %p60, %p61
      %s64 = sadd.s32 %s63, 1
      %p67 = scmp.eq.s32.totalorder %s13, 2
      %p68 = scmp.ne.s32.totalorder %s63, %s65
      %p69 = scmp.eq.s32.totalorder %s13, 0
      %p70 = por %p68, %p69
      %p71 = scmp.ne.s32.totalorder %s63, %s65
      %p72 = scmp.eq.s32.totalorder %s18, 2
      %p73 = por %p71, %p72
      %p74 = scmp.ne.s32.totalorder %s65, %s66
      %p75 = scmp.eq.s32.totalorder %s18, 0
      %p76 = por %p74, %p75
      %p77 = scmp.ne.s32.totalorder %s65, %s66
      %p78 = scmp.eq.s32.totalorder %s19, 2
      %p79 = por %p77, %p78
      %p81 = scmp.ne.s32.totalorder %s66, %s80
      %p82 = scmp.eq.s32.totalorder %s19, 0
      %p83 = por %p81, %p82
      %s85 = sadd.s32 %s84, 1
      %p88 = scmp.eq.s32.totalorder %s13, 2
      %p89 = scmp.ne.s32.totalorder %s84, %s86
      %p90 = scmp.eq.s32.totalorder %s13, 0
      %p91 = por %p89, %p90
      %p92 = scmp.ne.s32.totalorder %s84, %s86
      %p93 = scmp.eq.s32.totalorder %s18, 2
      %p94 = por %p92, %p93
      %p95 = scmp.ne.s32.totalorder %s86, %s87
      %p96 = scmp.eq.s32.totalorder %s18, 0
      %p97 = por %p95, %p96
      %p98 = scmp.ne.s32.totalorder %s86, %s87
      %p99 = scmp.eq.s32.totalorder %s19, 2
      %p100 = por %p98, %p99
      %p102 = scmp.ne.s32.totalorder %s87, %s101
      %p103 = scmp.eq.s32.totalorder %s19, 0
      %p104 = por %p102, %p103
      %s106 = sadd.s32 %s105, 1
      %p109 = scmp.eq.s32.totalorder %s13, 2
      %p110 = scmp.ne.s32.totalorder %s105, %s107
      %p111 = scmp.eq.s32.totalorder %s13, 0
      %p112 = por %p110, %p111
      %p113 = scmp.ne.s32.totalorder %s105, %s107
      %p114 = scmp.eq.s32.totalorder %s18, 2
      %p115 = por %p113, %p114
      %p116 = scmp.ne.s32.totalorder %s107, %s108
      %p117 = scmp.eq.s32.totalorder %s18, 0
      %p118 = por %p116, %p117
      %p119 = scmp.ne.s32.totalorder %s107, %s108
      %p120 = scmp.eq.s32.totalorder %s19, 2
      %p121 = por %p119, %p120
      %p123 = scmp.ne.s32.totalorder %s108, %s122
      %p124 = scmp.eq.s32.totalorder %s19, 0
      %p125 = por %p123, %p124
      %p126 = scmp.eq.s32.totalorder %s20, 2
      %s127 = scalar_select %p126, %s21, 0
      %p128 = scmp.eq.s32.totalorder %s32, 2
      %s129 = scalar_select %p128, %s28, 0
      %s130 = ssub.s32 %s127, %s129
      %p131 = scmp.eq.s32.totalorder %s130, 0
      %s133 = sadd.s32 %s132, 1
      %s134 = scalar_select %p131, %s132, %s133
      %p137 = pneg %p131
      %p138 = scmp.eq.s32.totalorder %s13, 2
      %p139 = por %p137, %p138
      %p140 = scmp.ne.s32.totalorder %s132, %s135
      %p141 = scmp.eq.s32.totalorder %s13, 0
      %p142 = por %p140, %p141
      %p143 = scmp.ne.s32.totalorder %s132, %s135
      %p144 = scmp.eq.s32.totalorder %s18, 2
      %p145 = por %p143, %p144
      %p146 = scmp.ne.s32.totalorder %s135, %s136
      %p147 = scmp.eq.s32.totalorder %s18, 0
      %p148 = por %p146, %p147
      %p149 = scmp.ne.s32.totalorder %s135, %s136
      %p150 = scmp.eq.s32.totalorder %s19, 2
      %p151 = por %p149, %p150
      %p153 = scmp.ne.s32.totalorder %s136, %s152
      %p154 = scmp.eq.s32.totalorder %s19, 0
      %p155 = por %p153, %p154
      %p156 = scmp.le.s32.totalorder 1, %s13
      %p157 = scmp.lt.s32.totalorder %s13, 4
      %p158 = pnand %p156, %p157
      %p159 = pneg %p158
      // Predicated region
      $region9: #{tpu_custom_call.1} parent=5 // pred_check
        _
      $region10: #{tpu_custom_call.1} parent=5 // pred_check_branch
        %161 = sbr.rel (%p158) target = $region12
      $region11: #{tpu_custom_call.1} parent=5 // pred_region
        %s162 = ssub.s32 %s13, 1
        // Predicated region
        $region13: #{tpu_custom_call.1} parent=11 // pred_check
          %p163 = pneg %p76
        $region14: #{tpu_custom_call.1} parent=11 // pred_check_branch
          %165 = sbr.rel (%p163) target = $region16
        $region15: #{tpu_custom_call.1} parent=11 // pred_region
          _
        $region16: #{tpu_custom_call.1} parent=11 // pred_fallthru
          _
        // Predicated region
        $region17: #{tpu_custom_call.1} parent=11 // pred_check
          %p166 = pneg %p97
        $region18: #{tpu_custom_call.1} parent=11 // pred_check_branch
          %168 = sbr.rel (%p166) target = $region20
        $region19: #{tpu_custom_call.1} parent=11 // pred_region
          _
        $region20: #{tpu_custom_call.1} parent=11 // pred_fallthru
          _
        // Predicated region
        $region21: #{tpu_custom_call.1} parent=11 // pred_check
          %p169 = pneg %p118
        $region22: #{tpu_custom_call.1} parent=11 // pred_check_branch
          %171 = sbr.rel (%p169) target = $region24
        $region23: #{tpu_custom_call.1} parent=11 // pred_region
          _
        $region24: #{tpu_custom_call.1} parent=11 // pred_fallthru
          _
      $region12: #{tpu_custom_call.1} parent=5 // pred_fallthru
        _
      %p172 = scmp.lt.s32.totalorder %s13, 3
      // Predicated region
      $region25: #{tpu_custom_call.1} parent=5 // pred_check
        %p173 = pneg %p172
      $region26: #{tpu_custom_call.1} parent=5 // pred_check_branch
        %175 = sbr.rel (%p173) target = $region28
      $region27: #{tpu_custom_call.1} parent=5 // pred_region
        // Predicated region
        $region29: #{tpu_custom_call.1} parent=27 // pred_check
          %p176 = pneg %p49
        $region30: #{tpu_custom_call.1} parent=27 // pred_check_branch
          %178 = sbr.rel (%p176) target = $region32
        $region31: #{tpu_custom_call.1} parent=27 // pred_region
          %p179 = scmp.eq.s32.totalorder %s20, 0
          %s180 = scalar_select %p179, %s21, 0
          %s181 = smul.u32 16, %s180
          %p182 = scmp.lt.s32.totalorder %s181, 15
          %s183 = scalar_select %p182, %s181, 15
          %s184 = smul.addr %s183, 8
          %s185 = scalar_lea.vmem %s0, %s184
          %p186 = scmp.eq.s32.totalorder %s20, 0
          %s187 = scalar_select %p186, %s21, 0
          %s188 = smul.u32 16, %s187
        $region32: #{tpu_custom_call.1} parent=27 // pred_fallthru
          _
      $region28: #{tpu_custom_call.1} parent=5 // pred_fallthru
        _
      %p189 = scmp.le.s32.totalorder 1, %s13
      %p190 = scmp.lt.s32.totalorder %s13, 4
      %p191 = pnand %p189, %p190
      %p192 = pneg %p191
      // Predicated region
      $region33: #{tpu_custom_call.1} parent=5 // pred_check
        _
      $region34: #{tpu_custom_call.1} parent=5 // pred_check_branch
        %194 = sbr.rel (%p191) target = $region36
      $region35: #{tpu_custom_call.1} parent=5 // pred_region
        %s195 = ssub.s32 %s13, 1
        %p196 = scmp.eq.s32.totalorder %s22, 0
        %s197 = scalar_select %p196, %s23, 0
        %s198 = smul.u32 16, %s197
        %p199 = scmp.lt.s32.totalorder %s198, 15
        %s200 = scalar_select %p199, %s198, 15
        %s201 = smul.addr %s200, 8
        %s202 = scalar_lea.vmem %s0, %s201
        %p203 = pneg %p55
        %p204 = pneg %p52
        %p205 = pneg %p76
        %p206 = pneg %p73
        %p207 = pneg %p97
        %p208 = pneg %p94
        %p209 = pneg %p118
        %p210 = pneg %p115
        %p211 = pneg %p148
        %p212 = pneg %p145
        %s213 = sand.u32 %s135, 1
        %s214 = scalar_lea.sflag [#allocation13], %s213
        %s215 = sand.u32 %s135, 1
        %s216 = scalar_lea.vmem [#allocation12], %s215
        %p217 = scmp.eq.s32.totalorder %s22, 0
        %s218 = scalar_select %p217, %s23, 0
        %s219 = smul.u32 16, %s218
        %p220 = scmp.lt.s32.totalorder %s219, 15
        %s221 = scalar_select %p220, %s219, 15
        %s222 = smul.addr %s221, 8
        %s223 = scalar_lea.vmem %s0, %s222
        %p224 = scmp.eq.s32.totalorder %s22, 0
        %s225 = scalar_select %p224, %s23, 0
        %s226 = smul.u32 16, %s225
        %p227 = scmp.eq.s32.totalorder %s22, 2
        %s228 = scalar_select %p227, %s23, 0
        %v229 = vlaneseq
        %v230 = vand.u32 %v229, 127
        %s231 = smul.u32 %s23, 128
        %v232 = vstv %s231
        %v233 = vadd.s32 %v232, %v230
        %vm234 = vcmp.lt.s32.totalorder %v233, 8
        %v235 = vsel %vm234, 1, 0
        %v236 = vcvt.s32.f32 %v235
        %p237 = scmp.eq.s32.totalorder %s22, 0
        %p238 = scmp.eq.s32.totalorder %s23, 0
        %p239 = pnand %p237, %p238
        %p240 = pneg %p239
        // Predicated region
        $region37: #{tpu_custom_call.1} parent=35 // pred_check
          _
        $region38: #{tpu_custom_call.1} parent=35 // pred_check_branch
          %242 = sbr.rel (%p239) target = $region40
        $region39: #{tpu_custom_call.1} parent=35 // pred_region
          %vm243 = vcmask 516096
          %244 = vst.msk [vmem:[#allocation2] sm:$0x1] %vm243, 0.0
          %245 = vst.msk [vmem:[#allocation3] sm:$0x1] %vm243, 0.0
          %vm246 = vcmask 253952
          %247 = vst.msk [vmem:[#allocation4] sm:$0x1] %vm246, 0.0
          %248 = vst.msk [vmem:[#allocation5] sm:$0x1] %vm246, 0.0
        $region40: #{tpu_custom_call.1} parent=35 // pred_fallthru
          _
        // Predicated region
        $region41: #{tpu_custom_call.1} parent=35 // pred_check
          %p249 = pneg %p237
        $region42: #{tpu_custom_call.1} parent=35 // pred_check_branch
          %251 = sbr.rel (%p249) target = $region44
        $region43: #{tpu_custom_call.1} parent=35 // pred_region
          %v252 = vld [vmem:[%s1] sm:$0xff]
          %v253 = vld [vmem:[%s1 + $0x8] sm:$0xff]
          %v254 = vld [vmem:[%s1 + $0x10] sm:$0xff]
          %v255 = vld [vmem:[%s1 + $0x18] sm:$0xff]
          %v256 = vld [vmem:[%s1 + $0x20] sm:$0xff]
          %v257 = vld [vmem:[%s1 + $0x28] sm:$0xff]
          %v258 = vld [vmem:[%s1 + $0x30] sm:$0xff]
          %v259 = vld [vmem:[%s1 + $0x38] sm:$0xff]
          %v260 = vld [vmem:[%s223] sm:$0xff]
          %v261 = vld [vmem:[%s223 + $0x8] sm:$0xff]
          %v262 = vld [vmem:[%s223 + $0x10] sm:$0xff]
          %v263 = vld [vmem:[%s223 + $0x18] sm:$0xff]
          %v264 = vld [vmem:[%s223 + $0x20] sm:$0xff]
          %v265 = vld [vmem:[%s223 + $0x28] sm:$0xff]
          %v266 = vld [vmem:[%s223 + $0x30] sm:$0xff]
          %v267 = vld [vmem:[%s223 + $0x38] sm:$0xff]
          %v268 = vld [vmem:[%s223 + $0x40] sm:$0xff]
          %v269 = vld [vmem:[%s223 + $0x48] sm:$0xff]
          %v270 = vld [vmem:[%s223 + $0x50] sm:$0xff]
          %v271 = vld [vmem:[%s223 + $0x58] sm:$0xff]
          %v272 = vld [vmem:[%s223 + $0x60] sm:$0xff]
          %v273 = vld [vmem:[%s223 + $0x68] sm:$0xff]
          %v274 = vld [vmem:[%s223 + $0x70] sm:$0xff]
          %v275 = vld [vmem:[%s223 + $0x78] sm:$0xff]
          %vm276 = vcmask 138240
          %v278 = vsel %vm276, %v252, 0
          %v281 = vsel %vm276, %v253, 0
          %v284 = vsel %vm276, %v254, 0
          %v287 = vsel %vm276, %v255, 0
          %v290 = vsel %vm276, %v256, 0
          %v293 = vsel %vm276, %v257, 0
          %v296 = vsel %vm276, %v258, 0
          %v299 = vsel %vm276, %v259, 0
          %v302 = vsel %vm276, %v260, 0
          %v305 = vsel %vm276, %v261, 0
          %v308 = vsel %vm276, %v262, 0
          %v311 = vsel %vm276, %v263, 0
          %v314 = vsel %vm276, %v264, 0
          %v317 = vsel %vm276, %v265, 0
          %v320 = vsel %vm276, %v266, 0
          %v323 = vsel %vm276, %v267, 0
          %v326 = vsel %vm276, %v268, 0
          %v329 = vsel %vm276, %v269, 0
          %v332 = vsel %vm276, %v270, 0
          %v335 = vsel %vm276, %v271, 0
          %v338 = vsel %vm276, %v272, 0
          %v341 = vsel %vm276, %v273, 0
          %v344 = vsel %vm276, %v274, 0
          %v347 = vsel %vm276, %v275, 0
          %349 = vmatprep.subr.mxu0 0.0
          %350 = vmatpush1.xpose.msra.mxu0 %v302
          %351 = vmatprep.subr.mxu0 0.0
          %352 = vmatpush1.xpose.msra.mxu0 %v305
          %353 = vmatprep.subr.mxu0 0.0
          %354 = vmatpush1.xpose.msra.mxu0 %v308
          %355 = vmatprep.subr.mxu0 0.0
          %356 = vmatpush1.xpose.msra.mxu0 %v311
          %357 = vmatprep.subr.mxu0 0.0
          %358 = vmatpush1.xpose.msra.mxu0 %v314
          %359 = vmatprep.subr.mxu0 0.0
          %360 = vmatpush1.xpose.msra.mxu0 %v317
          %361 = vmatprep.subr.mxu0 0.0
          %362 = vmatpush1.xpose.msra.mxu0 %v320
          %363 = vmatprep.subr.mxu0 0.0
          %364 = vmatpush1.xpose.msra.mxu0 %v323
          %365 = vmatprep.subr.mxu0 0.0
          %366 = vmatpush1.xpose.msra.mxu0 %v326
          %367 = vmatprep.subr.mxu0 0.0
          %368 = vmatpush1.xpose.msra.mxu0 %v329
          %369 = vmatprep.subr.mxu0 0.0
          %370 = vmatpush1.xpose.msra.mxu0 %v332
          %371 = vmatprep.subr.mxu0 0.0
          %372 = vmatpush1.xpose.msra.mxu0 %v335
          %373 = vmatprep.subr.mxu0 0.0
          %374 = vmatpush1.xpose.msra.mxu0 %v338
          %375 = vmatprep.subr.mxu0 0.0
          %376 = vmatpush1.xpose.msra.mxu0 %v341
          %377 = vmatprep.subr.mxu0 0.0
          %378 = vmatpush1.xpose.msra.mxu0 %v344
          %379 = vmatprep.subr.mxu0 0.0
          %380 = vmatpush1.xpose.msra.mxu0 %v347
          %381 = vmatprep.subr.mxu0 0.0
          %382 = vmatpush1.xpose.msra.mxu0 0.0
          %383 = vmatprep.subr.mxu0 0.0
          %384 = vmatpush1.xpose.msra.mxu0 0.0
          %385 = vmatprep.subr.mxu0 0.0
          %386 = vmatpush1.xpose.msra.mxu0 0.0
          %387 = vmatprep.subr.mxu0 0.0
          %388 = vmatpush1.xpose.msra.mxu0 0.0
          %389 = vmatprep.subr.mxu0 0.0
          %390 = vmatpush1.xpose.msra.mxu0 0.0
          %391 = vmatprep.subr.mxu0 0.0
          %392 = vmatpush1.xpose.msra.mxu0 0.0
          %393 = vmatprep.subr.mxu0 0.0
          %394 = vmatpush1.xpose.msra.mxu0 0.0
          %395 = vmatprep.subr.mxu0 0.0
          %396 = vmatpush1.xpose.msra.mxu0 0.0
          %397 = vmatprep.subr.mxu0 0.0
          %398 = vmatpush1.xpose.msra.mxu0 0.0
          %399 = vmatprep.subr.mxu0 0.0
          %400 = vmatpush1.xpose.msra.mxu0 0.0
          %401 = vmatprep.subr.mxu0 0.0
          %402 = vmatpush1.xpose.msra.mxu0 0.0
          %403 = vmatprep.subr.mxu0 0.0
          %404 = vmatpush1.xpose.msra.mxu0 0.0
          %405 = vmatprep.subr.mxu0 0.0
          %406 = vmatpush1.xpose.msra.mxu0 0.0
          %407 = vmatprep.subr.mxu0 0.0
          %408 = vmatpush1.xpose.msra.mxu0 0.0
          %409 = vmatprep.subr.mxu0 0.0
          %410 = vmatpush1.xpose.msra.mxu0 0.0
          %411 = vmatprep.subr.mxu0 0.0
          %412 = vmatpush1.xpose.msra.mxu0 0.0
          %413 = vmatprep.mubr.f32.mxu0 0.0
          %414 = vmatmul.mubr.f32.gmra.mrb[0].mxu0 %v278
          %v415 = vpop.f32.mrb[0].mxu0
          %v416 = vadd.f32 0.0, %v415
          %v417 = vpop.f32.mrb[0].mxu0
          %418 = vmatprep.mubr.f32.mxu0 0.0
          %419 = vmatmul.mubr.f32.gmra.mrb[0].mxu0 %v281
          %v420 = vpop.f32.mrb[0].mxu0
          %v421 = vadd.f32 0.0, %v420
          %v422 = vpop.f32.mrb[0].mxu0
          %423 = vmatprep.mubr.f32.mxu0 0.0
          %424 = vmatmul.mubr.f32.gmra.mrb[0].mxu0 %v284
          %v425 = vpop.f32.mrb[0].mxu0
          %v426 = vadd.f32 0.0, %v425
          %v427 = vpop.f32.mrb[0].mxu0
          %428 = vmatprep.mubr.f32.mxu0 0.0
          %429 = vmatmul.mubr.f32.gmra.mrb[0].mxu0 %v287
          %v430 = vpop.f32.mrb[0].mxu0
          %v431 = vadd.f32 0.0, %v430
          %v432 = vpop.f32.mrb[0].mxu0
          %433 = vmatprep.mubr.f32.mxu0 0.0
          %434 = vmatmul.mubr.f32.gmra.mrb[0].mxu0 %v290
          %v435 = vpop.f32.mrb[0].mxu0
          %v436 = vadd.f32 0.0, %v435
          %v437 = vpop.f32.mrb[0].mxu0
          %438 = vmatprep.mubr.f32.mxu0 0.0
          %439 = vmatmul.mubr.f32.gmra.mrb[0].mxu0 %v293
          %v440 = vpop.f32.mrb[0].mxu0
          %v441 = vadd.f32 0.0, %v440
          %v442 = vpop.f32.mrb[0].mxu0
          %443 = vmatprep.mubr.f32.mxu0 0.0
          %444 = vmatmul.mubr.f32.gmra.mrb[0].mxu0 %v296
          %v445 = vpop.f32.mrb[0].mxu0
          %v446 = vadd.f32 0.0, %v445
          %v447 = vpop.f32.mrb[0].mxu0
          %448 = vmatprep.mubr.f32.mxu0 0.0
          %449 = vmatmul.mubr.f32.gmra.mrb[0].mxu0 %v299
          %v450 = vpop.f32.mrb[0].mxu0
          %v451 = vadd.f32 0.0, %v450
          %v452 = vpop.f32.mrb[0].mxu0
          %453 = vdwg.mxu0
          %v454 = vmax.f32 %v416, 0.0
          %v455 = vmax.f32 %v421, 0.0
          %v456 = vmax.f32 %v426, 0.0
          %v457 = vmax.f32 %v431, 0.0
          %v458 = vmax.f32 %v436, 0.0
          %v459 = vmax.f32 %v441, 0.0
          %v460 = vmax.f32 %v446, 0.0
          %v461 = vmax.f32 %v451, 0.0
          %s462 = smul.u32 %s23, 64
          %s463 = scalar_lea.vmem [#allocation10], %s462
          %464 = vst [vmem:[%s463] sm:$0xff] %v454
          %465 = vst [vmem:[%s463 + $0x8] sm:$0xff] %v455
          %466 = vst [vmem:[%s463 + $0x10] sm:$0xff] %v456
          %467 = vst [vmem:[%s463 + $0x18] sm:$0xff] %v457
          %468 = vst [vmem:[%s463 + $0x20] sm:$0xff] %v458
          %469 = vst [vmem:[%s463 + $0x28] sm:$0xff] %v459
          %470 = vst [vmem:[%s463 + $0x30] sm:$0xff] %v460
          %471 = vst [vmem:[%s463 + $0x38] sm:$0xff] %v461
          %v472 = vld [vmem:[#allocation2] sm:$0x1]
          %473 = vmatprep.subr.mxu0 0.0
          %474 = vmatpush1.xpose.msra.mxu0 %v454
          %475 = vmatprep.subr.mxu0 0.0
          %476 = vmatpush1.xpose.msra.mxu0 %v455
          %477 = vmatprep.subr.mxu0 0.0
          %478 = vmatpush1.xpose.msra.mxu0 %v456
          %479 = vmatprep.subr.mxu0 0.0
          %480 = vmatpush1.xpose.msra.mxu0 %v457
          %481 = vmatprep.subr.mxu0 0.0
          %482 = vmatpush1.xpose.msra.mxu0 %v458
          %483 = vmatprep.subr.mxu0 0.0
          %484 = vmatpush1.xpose.msra.mxu0 %v459
          %485 = vmatprep.subr.mxu0 0.0
          %486 = vmatpush1.xpose.msra.mxu0 %v460
          %487 = vmatprep.subr.mxu0 0.0
          %488 = vmatpush1.xpose.msra.mxu0 %v461
          %489 = vmatprep.subr.mxu0 0.0
          %490 = vmatpush1.xpose.msra.mxu0 0.0
          %491 = vmatprep.subr.mxu0 0.0
          %492 = vmatpush1.xpose.msra.mxu0 0.0
          %493 = vmatprep.subr.mxu0 0.0
          %494 = vmatpush1.xpose.msra.mxu0 0.0
          %495 = vmatprep.subr.mxu0 0.0
          %496 = vmatpush1.xpose.msra.mxu0 0.0
          %497 = vmatprep.subr.mxu0 0.0
          %498 = vmatpush1.xpose.msra.mxu0 0.0
          %499 = vmatprep.subr.mxu0 0.0
          %500 = vmatpush1.xpose.msra.mxu0 0.0
          %501 = vmatprep.subr.mxu0 0.0
          %502 = vmatpush1.xpose.msra.mxu0 0.0
          %503 = vmatprep.subr.mxu0 0.0
          %504 = vmatpush1.xpose.msra.mxu0 0.0
          %505 = vmatprep.subr.mxu0 0.0
          %506 = vmatpush1.xpose.msra.mxu0 0.0
          %507 = vmatprep.subr.mxu0 0.0
          %508 = vmatpush1.xpose.msra.mxu0 0.0
          %509 = vmatprep.subr.mxu0 0.0
          %510 = vmatpush1.xpose.msra.mxu0 0.0
          %511 = vmatprep.subr.mxu0 0.0
          %512 = vmatpush1.xpose.msra.mxu0 0.0
          %513 = vmatprep.subr.mxu0 0.0
          %514 = vmatpush1.xpose.msra.mxu0 0.0
          %515 = vmatprep.subr.mxu0 0.0
          %516 = vmatpush1.xpose.msra.mxu0 0.0
          %517 = vmatprep.subr.mxu0 0.0
          %518 = vmatpush1.xpose.msra.mxu0 0.0
          %519 = vmatprep.subr.mxu0 0.0
          %520 = vmatpush1.xpose.msra.mxu0 0.0
          %521 = vmatprep.subr.mxu0 0.0
          %522 = vmatpush1.xpose.msra.mxu0 0.0
          %523 = vmatprep.subr.mxu0 0.0
          %524 = vmatpush1.xpose.msra.mxu0 0.0
          %525 = vmatprep.subr.mxu0 0.0
          %526 = vmatpush1.xpose.msra.mxu0 0.0
          %527 = vmatprep.subr.mxu0 0.0
          %528 = vmatpush1.xpose.msra.mxu0 0.0
          %529 = vmatprep.subr.mxu0 0.0
          %530 = vmatpush1.xpose.msra.mxu0 0.0
          %531 = vmatprep.subr.mxu0 0.0
          %532 = vmatpush1.xpose.msra.mxu0 0.0
          %533 = vmatprep.subr.mxu0 0.0
          %534 = vmatpush1.xpose.msra.mxu0 0.0
          %535 = vmatprep.subr.mxu0 0.0
          %536 = vmatpush1.xpose.msra.mxu0 0.0
          %537 = vmatprep.mubr.f32.mxu0 0.0
          %538 = vmatmul.mubr.f32.gmra.mrb[0].mxu0 %v236
          %v539 = vpop.f32.mrb[0].mxu0
          %v540 = vadd.f32 0.0, %v539
          %v541 = vpop.f32.mrb[0].mxu0
          %542 = vdwg.mxu0
          %v543 = vadd.f32 %v472, %v540
          %vm544 = vcmask 516096
          %545 = vst.msk [vmem:[#allocation2] sm:$0x1] %vm544, %v543
          %v546 = vld [vmem:[#allocation3] sm:$0x1]
          %v547 = vmul.f32 %v454, %v454
          %v548 = vmul.f32 %v455, %v455
          %v549 = vmul.f32 %v456, %v456
          %v550 = vmul.f32 %v457, %v457
          %v551 = vmul.f32 %v458, %v458
          %v552 = vmul.f32 %v459, %v459
          %v553 = vmul.f32 %v460, %v460
          %v554 = vmul.f32 %v461, %v461
          %555 = vmatprep.subr.mxu0 0.0
          %556 = vmatpush1.xpose.msra.mxu0 %v547
          %557 = vmatprep.subr.mxu0 0.0
          %558 = vmatpush1.xpose.msra.mxu0 %v548
          %559 = vmatprep.subr.mxu0 0.0
          %560 = vmatpush1.xpose.msra.mxu0 %v549
          %561 = vmatprep.subr.mxu0 0.0
          %562 = vmatpush1.xpose.msra.mxu0 %v550
          %563 = vmatprep.subr.mxu0 0.0
          %564 = vmatpush1.xpose.msra.mxu0 %v551
          %565 = vmatprep.subr.mxu0 0.0
          %566 = vmatpush1.xpose.msra.mxu0 %v552
          %567 = vmatprep.subr.mxu0 0.0
          %568 = vmatpush1.xpose.msra.mxu0 %v553
          %569 = vmatprep.subr.mxu0 0.0
          %570 = vmatpush1.xpose.msra.mxu0 %v554
          %571 = vmatprep.subr.mxu0 0.0
          %572 = vmatpush1.xpose.msra.mxu0 0.0
          %573 = vmatprep.subr.mxu0 0.0
          %574 = vmatpush1.xpose.msra.mxu0 0.0
          %575 = vmatprep.subr.mxu0 0.0
          %576 = vmatpush1.xpose.msra.mxu0 0.0
          %577 = vmatprep.subr.mxu0 0.0
          %578 = vmatpush1.xpose.msra.mxu0 0.0
          %579 = vmatprep.subr.mxu0 0.0
          %580 = vmatpush1.xpose.msra.mxu0 0.0
          %581 = vmatprep.subr.mxu0 0.0
          %582 = vmatpush1.xpose.msra.mxu0 0.0
          %583 = vmatprep.subr.mxu0 0.0
          %584 = vmatpush1.xpose.msra.mxu0 0.0
          %585 = vmatprep.subr.mxu0 0.0
          %586 = vmatpush1.xpose.msra.mxu0 0.0
          %587 = vmatprep.subr.mxu0 0.0
          %588 = vmatpush1.xpose.msra.mxu0 0.0
          %589 = vmatprep.subr.mxu0 0.0
          %590 = vmatpush1.xpose.msra.mxu0 0.0
          %591 = vmatprep.subr.mxu0 0.0
          %592 = vmatpush1.xpose.msra.mxu0 0.0
          %593 = vmatprep.subr.mxu0 0.0
          %594 = vmatpush1.xpose.msra.mxu0 0.0
          %595 = vmatprep.subr.mxu0 0.0
          %596 = vmatpush1.xpose.msra.mxu0 0.0
          %597 = vmatprep.subr.mxu0 0.0
          %598 = vmatpush1.xpose.msra.mxu0 0.0
          %599 = vmatprep.subr.mxu0 0.0
          %600 = vmatpush1.xpose.msra.mxu0 0.0
          %601 = vmatprep.subr.mxu0 0.0
          %602 = vmatpush1.xpose.msra.mxu0 0.0
          %603 = vmatprep.subr.mxu0 0.0
          %604 = vmatpush1.xpose.msra.mxu0 0.0
          %605 = vmatprep.subr.mxu0 0.0
          %606 = vmatpush1.xpose.msra.mxu0 0.0
          %607 = vmatprep.subr.mxu0 0.0
          %608 = vmatpush1.xpose.msra.mxu0 0.0
          %609 = vmatprep.subr.mxu0 0.0
          %610 = vmatpush1.xpose.msra.mxu0 0.0
          %611 = vmatprep.subr.mxu0 0.0
          %612 = vmatpush1.xpose.msra.mxu0 0.0
          %613 = vmatprep.subr.mxu0 0.0
          %614 = vmatpush1.xpose.msra.mxu0 0.0
          %615 = vmatprep.subr.mxu0 0.0
          %616 = vmatpush1.xpose.msra.mxu0 0.0
          %617 = vmatprep.subr.mxu0 0.0
          %618 = vmatpush1.xpose.msra.mxu0 0.0
          %619 = vmatprep.mubr.f32.mxu0 0.0
          %620 = vmatmul.mubr.f32.gmra.mrb[0].mxu0 %v236
          %v621 = vpop.f32.mrb[0].mxu0
          %v622 = vadd.f32 0.0, %v621
          %v623 = vpop.f32.mrb[0].mxu0
          %624 = vdwg.mxu0
          %v625 = vadd.f32 %v546, %v622
          %626 = vst.msk [vmem:[#allocation3] sm:$0x1] %vm544, %v625
        $region44: #{tpu_custom_call.1} parent=35 // pred_fallthru
          _
        %p627 = scmp.eq.s32.totalorder %s22, 1
        %p628 = pnand %p627, %p238
        %p629 = pneg %p628
        // Predicated region
        $region45: #{tpu_custom_call.1} parent=35 // pred_check
          _
        $region46: #{tpu_custom_call.1} parent=35 // pred_check_branch
          %631 = sbr.rel (%p628) target = $region48
        $region47: #{tpu_custom_call.1} parent=35 // pred_region
          %v632 = vld [vmem:[#allocation2] sm:$0x1]
          %v633 = vmul.f32 %v632, 0.125
          %v634 = vld [vmem:[#allocation3] sm:$0x1]
          %v635 = vmul.f32 %v634, 0.125
          %v636 = vmul.f32 %v633, %v633
          %v637 = vsub.f32 %v635, %v636
          %v638 = vmax.f32 %v637, 0.0
          %v639 = vld [vmem:[%s3] sm:$0x1]
          %v640 = vadd.f32 %v638, 1e-05
          %v641 = vrsqrt.pop %v640
          %v642 = vmul.f32 %v639, %v641
          %v643 = vld [vmem:[%s3 + $0x1] sm:$0x1]
          %v644 = vmul.f32 %v633, %v642
          %v645 = vsub.f32 %v643, %v644
          %v646 = vld [vmem:[%s2] sm:$0xff]
          %v647 = vld [vmem:[%s2 + $0x8] sm:$0xff]
          %v648 = vld [vmem:[%s2 + $0x10] sm:$0xff]
          %v649 = vld [vmem:[%s2 + $0x18] sm:$0xff]
          %v650 = vlaneseq
          %v651 = vshrl.u32 %v650, 7
          %v652 = vsub.s32 0, %v651
          %v653 = vrot.slane %v642, %v652
          %v654 = vmul.f32 %v646, %v653
          %v655 = vmul.f32 %v647, %v653
          %v656 = vmul.f32 %v648, %v653
          %v657 = vmul.f32 %v649, %v653
          %vm658 = vcmask 523264
          %659 = vst.msk [vmem:[#allocation6] sm:$0xff] %vm658, %v654
          %660 = vst.msk [vmem:[#allocation6 + $0x8] sm:$0xff] %vm658, %v655
          %661 = vst.msk [vmem:[#allocation6 + $0x10] sm:$0xff] %vm658, %v656
          %662 = vst.msk [vmem:[#allocation6 + $0x18] sm:$0xff] %vm658, %v657
          %v663 = vlaneseq
          %v664 = vshrl.u32 %v663, 7
          %v665 = vsub.s32 0, %v664
          %v666 = vrot.slane %v645, %v665
          %v667 = vmul.f32 %v646, %v666
          %v668 = vmul.f32 %v647, %v666
          %v669 = vmul.f32 %v648, %v666
          %v670 = vmul.f32 %v649, %v666
          %v671 = vsel %vm658, %v667, 0.0
          %672 = vadd.xlane.f32.xlu0 %v671
          %v673 = vpop.xlane.xlu0 %672
          %v674 = vsel %vm658, %v668, 0.0
          %675 = vadd.xlane.f32.xlu0 %v674
          %v676 = vpop.xlane.xlu0 %675
          %v677 = vsel %vm658, %v669, 0.0
          %678 = vadd.xlane.f32.xlu0 %v677
          %v679 = vpop.xlane.xlu0 %678
          %v680 = vsel %vm658, %v670, 0.0
          %681 = vadd.xlane.f32.xlu0 %v680
          %v682 = vpop.xlane.xlu0 %681
          %v683 = vadd.f32 %v673, %v646
          %v684 = vadd.f32 %v676, %v647
          %v685 = vadd.f32 %v679, %v648
          %v686 = vadd.f32 %v682, %v649
          %691 = vrot.lane.b32.xlu0 %v683, 64
          %v692 = vpop.permute.xlu0 %691
          %693 = vrot.lane.b32.xlu0 %v684, 64
          %v694 = vpop.permute.xlu0 %693
          %695 = vrot.lane.b32.xlu0 %v685, 64
          %v696 = vpop.permute.xlu0 %695
          %697 = vrot.lane.b32.xlu0 %v686, 64
          %v698 = vpop.permute.xlu0 %697
          %vm703 = vcmask 7168
          %704 = vst.msk [vmem:[#allocation7] sm:$0xff] %vm703, %v692
          %705 = vst.msk [vmem:[#allocation7 + $0x8] sm:$0xff] %vm703, %v694
          %706 = vst.msk [vmem:[#allocation7 + $0x10] sm:$0xff] %vm703, %v696
          %707 = vst.msk [vmem:[#allocation7 + $0x18] sm:$0xff] %vm703, %v698
        $region48: #{tpu_custom_call.1} parent=35 // pred_fallthru
          _
        // Predicated region
        $region49: #{tpu_custom_call.1} parent=35 // pred_check
          %p708 = pneg %p627
        $region50: #{tpu_custom_call.1} parent=35 // pred_check_branch
          %710 = sbr.rel (%p708) target = $region52
        $region51: #{tpu_custom_call.1} parent=35 // pred_region
          %s711 = smul.u32 %s23, 64
          %s712 = scalar_lea.vmem [#allocation10], %s711
          %v713 = vld [vmem:[%s712] sm:$0xff]
          %v714 = vld [vmem:[%s712 + $0x8] sm:$0xff]
          %v715 = vld [vmem:[%s712 + $0x10] sm:$0xff]
          %v716 = vld [vmem:[%s712 + $0x18] sm:$0xff]
          %v717 = vld [vmem:[%s712 + $0x20] sm:$0xff]
          %v718 = vld [vmem:[%s712 + $0x28] sm:$0xff]
          %v719 = vld [vmem:[%s712 + $0x30] sm:$0xff]
          %v720 = vld [vmem:[%s712 + $0x38] sm:$0xff]
          %v721 = vld [vmem:[#allocation6] sm:$0xff]
          %v722 = vld [vmem:[#allocation6 + $0x8] sm:$0xff]
          %v723 = vld [vmem:[#allocation6 + $0x10] sm:$0xff]
          %v724 = vld [vmem:[#allocation6 + $0x18] sm:$0xff]
          %v725 = vld [vmem:[#allocation7] sm:$0xff]
          %v726 = vld [vmem:[#allocation7 + $0x8] sm:$0xff]
          %v727 = vld [vmem:[#allocation7 + $0x10] sm:$0xff]
          %v728 = vld [vmem:[#allocation7 + $0x18] sm:$0xff]
          %730 = vset.pattern.permute.xlu0 0
          %731 = vperm.xlu0 %730, %v725
          %v732 = vpop.permute.xlu0 %731
          %735 = vset.pattern.permute.xlu0 0
          %736 = vperm.xlu0 %735, %v726
          %v737 = vpop.permute.xlu0 %736
          %740 = vset.pattern.permute.xlu0 0
          %741 = vperm.xlu0 %740, %v727
          %v742 = vpop.permute.xlu0 %741
          %745 = vset.pattern.permute.xlu0 0
          %746 = vperm.xlu0 %745, %v728
          %v747 = vpop.permute.xlu0 %746
          %vm749 = vcmask 523264
          %v751 = vsel %vm749, %v721, 0
          %v754 = vsel %vm749, %v722, 0
          %v757 = vsel %vm749, %v723, 0
          %v760 = vsel %vm749, %v724, 0
          %762 = vmatprep.subr.mxu0 0.0
          %763 = vmatpush1.msra.mxu0 %v713
          %764 = vmatprep.subr.mxu0 0.0
          %765 = vmatpush1.msra.mxu0 %v714
          %766 = vmatprep.subr.mxu0 0.0
          %767 = vmatpush1.msra.mxu0 %v715
          %768 = vmatprep.subr.mxu0 0.0
          %769 = vmatpush1.msra.mxu0 %v716
          %770 = vmatprep.subr.mxu0 0.0
          %771 = vmatpush1.msra.mxu0 %v717
          %772 = vmatprep.subr.mxu0 0.0
          %773 = vmatpush1.msra.mxu0 %v718
          %774 = vmatprep.subr.mxu0 0.0
          %775 = vmatpush1.msra.mxu0 %v719
          %776 = vmatprep.subr.mxu0 0.0
          %777 = vmatpush1.msra.mxu0 %v720
          %778 = vmatprep.subr.mxu0 0.0
          %779 = vmatpush1.msra.mxu0 0.0
          %780 = vmatprep.subr.mxu0 0.0
          %781 = vmatpush1.msra.mxu0 0.0
          %782 = vmatprep.subr.mxu0 0.0
          %783 = vmatpush1.msra.mxu0 0.0
          %784 = vmatprep.subr.mxu0 0.0
          %785 = vmatpush1.msra.mxu0 0.0
          %786 = vmatprep.subr.mxu0 0.0
          %787 = vmatpush1.msra.mxu0 0.0
          %788 = vmatprep.subr.mxu0 0.0
          %789 = vmatpush1.msra.mxu0 0.0
          %790 = vmatprep.subr.mxu0 0.0
          %791 = vmatpush1.msra.mxu0 0.0
          %792 = vmatprep.subr.mxu0 0.0
          %793 = vmatpush1.msra.mxu0 0.0
          %794 = vmatprep.subr.mxu0 0.0
          %795 = vmatpush1.msra.mxu0 0.0
          %796 = vmatprep.subr.mxu0 0.0
          %797 = vmatpush1.msra.mxu0 0.0
          %798 = vmatprep.subr.mxu0 0.0
          %799 = vmatpush1.msra.mxu0 0.0
          %800 = vmatprep.subr.mxu0 0.0
          %801 = vmatpush1.msra.mxu0 0.0
          %802 = vmatprep.subr.mxu0 0.0
          %803 = vmatpush1.msra.mxu0 0.0
          %804 = vmatprep.subr.mxu0 0.0
          %805 = vmatpush1.msra.mxu0 0.0
          %806 = vmatprep.subr.mxu0 0.0
          %807 = vmatpush1.msra.mxu0 0.0
          %808 = vmatprep.subr.mxu0 0.0
          %809 = vmatpush1.msra.mxu0 0.0
          %810 = vmatprep.subr.mxu0 0.0
          %811 = vmatpush1.msra.mxu0 0.0
          %812 = vmatprep.subr.mxu0 0.0
          %813 = vmatpush1.msra.mxu0 0.0
          %814 = vmatprep.subr.mxu0 0.0
          %815 = vmatpush1.msra.mxu0 0.0
          %816 = vmatprep.subr.mxu0 0.0
          %817 = vmatpush1.msra.mxu0 0.0
          %818 = vmatprep.subr.mxu0 0.0
          %819 = vmatpush1.msra.mxu0 0.0
          %820 = vmatprep.subr.mxu0 0.0
          %821 = vmatpush1.msra.mxu0 0.0
          %822 = vmatprep.subr.mxu0 0.0
          %823 = vmatpush1.msra.mxu0 0.0
          %824 = vmatprep.subr.mxu0 0.0
          %825 = vmatpush1.msra.mxu0 0.0
          %826 = vmatprep.mubr.f32.mxu0 0.0
          %827 = vmatmul.mubr.f32.gmra.mrb[0].mxu0 %v751
          %v828 = vpop.f32.mrb[0].mxu0
          %v829 = vadd.f32 %v732, %v828
          %v830 = vpop.f32.mrb[0].mxu0
          %831 = vmatprep.mubr.f32.mxu0 0.0
          %832 = vmatmul.mubr.f32.gmra.mrb[0].mxu0 %v754
          %v833 = vpop.f32.mrb[0].mxu0
          %v834 = vadd.f32 %v737, %v833
          %v835 = vpop.f32.mrb[0].mxu0
          %836 = vmatprep.mubr.f32.mxu0 0.0
          %837 = vmatmul.mubr.f32.gmra.mrb[0].mxu0 %v757
          %v838 = vpop.f32.mrb[0].mxu0
          %v839 = vadd.f32 %v742, %v838
          %v840 = vpop.f32.mrb[0].mxu0
          %841 = vmatprep.mubr.f32.mxu0 0.0
          %842 = vmatmul.mubr.f32.gmra.mrb[0].mxu0 %v760
          %v843 = vpop.f32.mrb[0].mxu0
          %v844 = vadd.f32 %v747, %v843
          %v845 = vpop.f32.mrb[0].mxu0
          %846 = vdwg.mxu0
          %v847 = vmax.f32 %v829, 0.0
          %v848 = vmax.f32 %v834, 0.0
          %v849 = vmax.f32 %v839, 0.0
          %v850 = vmax.f32 %v844, 0.0
          %s851 = smul.u32 %s23, 32
          %s852 = scalar_lea.vmem [#allocation11], %s851
          %853 = vst [vmem:[%s852] sm:$0xff] %v847
          %854 = vst [vmem:[%s852 + $0x8] sm:$0xff] %v848
          %855 = vst [vmem:[%s852 + $0x10] sm:$0xff] %v849
          %856 = vst [vmem:[%s852 + $0x18] sm:$0xff] %v850
          %v857 = vld [vmem:[#allocation4] sm:$0x1]
          %858 = vmatprep.subr.mxu0 0.0
          %859 = vmatpush1.xpose.msra.mxu0 %v847
          %860 = vmatprep.subr.mxu0 0.0
          %861 = vmatpush1.xpose.msra.mxu0 %v848
          %862 = vmatprep.subr.mxu0 0.0
          %863 = vmatpush1.xpose.msra.mxu0 %v849
          %864 = vmatprep.subr.mxu0 0.0
          %865 = vmatpush1.xpose.msra.mxu0 %v850
          %866 = vmatprep.subr.mxu0 0.0
          %867 = vmatpush1.xpose.msra.mxu0 0.0
          %868 = vmatprep.subr.mxu0 0.0
          %869 = vmatpush1.xpose.msra.mxu0 0.0
          %870 = vmatprep.subr.mxu0 0.0
          %871 = vmatpush1.xpose.msra.mxu0 0.0
          %872 = vmatprep.subr.mxu0 0.0
          %873 = vmatpush1.xpose.msra.mxu0 0.0
          %874 = vmatprep.subr.mxu0 0.0
          %875 = vmatpush1.xpose.msra.mxu0 0.0
          %876 = vmatprep.subr.mxu0 0.0
          %877 = vmatpush1.xpose.msra.mxu0 0.0
          %878 = vmatprep.subr.mxu0 0.0
          %879 = vmatpush1.xpose.msra.mxu0 0.0
          %880 = vmatprep.subr.mxu0 0.0
          %881 = vmatpush1.xpose.msra.mxu0 0.0
          %882 = vmatprep.subr.mxu0 0.0
          %883 = vmatpush1.xpose.msra.mxu0 0.0
          %884 = vmatprep.subr.mxu0 0.0
          %885 = vmatpush1.xpose.msra.mxu0 0.0
          %886 = vmatprep.subr.mxu0 0.0
          %887 = vmatpush1.xpose.msra.mxu0 0.0
          %888 = vmatprep.subr.mxu0 0.0
          %889 = vmatpush1.xpose.msra.mxu0 0.0
          %890 = vmatprep.subr.mxu0 0.0
          %891 = vmatpush1.xpose.msra.mxu0 0.0
          %892 = vmatprep.subr.mxu0 0.0
          %893 = vmatpush1.xpose.msra.mxu0 0.0
          %894 = vmatprep.subr.mxu0 0.0
          %895 = vmatpush1.xpose.msra.mxu0 0.0
          %896 = vmatprep.subr.mxu0 0.0
          %897 = vmatpush1.xpose.msra.mxu0 0.0
          %898 = vmatprep.subr.mxu0 0.0
          %899 = vmatpush1.xpose.msra.mxu0 0.0
          %900 = vmatprep.subr.mxu0 0.0
          %901 = vmatpush1.xpose.msra.mxu0 0.0
          %902 = vmatprep.subr.mxu0 0.0
          %903 = vmatpush1.xpose.msra.mxu0 0.0
          %904 = vmatprep.subr.mxu0 0.0
          %905 = vmatpush1.xpose.msra.mxu0 0.0
          %906 = vmatprep.subr.mxu0 0.0
          %907 = vmatpush1.xpose.msra.mxu0 0.0
          %908 = vmatprep.subr.mxu0 0.0
          %909 = vmatpush1.xpose.msra.mxu0 0.0
          %910 = vmatprep.subr.mxu0 0.0
          %911 = vmatpush1.xpose.msra.mxu0 0.0
          %912 = vmatprep.subr.mxu0 0.0
          %913 = vmatpush1.xpose.msra.mxu0 0.0
          %914 = vmatprep.subr.mxu0 0.0
          %915 = vmatpush1.xpose.msra.mxu0 0.0
          %916 = vmatprep.subr.mxu0 0.0
          %917 = vmatpush1.xpose.msra.mxu0 0.0
          %918 = vmatprep.subr.mxu0 0.0
          %919 = vmatpush1.xpose.msra.mxu0 0.0
          %920 = vmatprep.subr.mxu0 0.0
          %921 = vmatpush1.xpose.msra.mxu0 0.0
          %922 = vmatprep.mubr.f32.mxu0 0.0
          %923 = vmatmul.mubr.f32.gmra.mrb[0].mxu0 %v236
          %v924 = vpop.f32.mrb[0].mxu0
          %v925 = vadd.f32 0.0, %v924
          %v926 = vpop.f32.mrb[0].mxu0
          %927 = vdwg.mxu0
          %v928 = vadd.f32 %v857, %v925
          %vm929 = vcmask 253952
          %930 = vst.msk [vmem:[#allocation4] sm:$0x1] %vm929, %v928
          %v931 = vld [vmem:[#allocation5] sm:$0x1]
          %v932 = vmul.f32 %v847, %v847
          %v933 = vmul.f32 %v848, %v848
          %v934 = vmul.f32 %v849, %v849
          %v935 = vmul.f32 %v850, %v850
          %936 = vmatprep.subr.mxu0 0.0
          %937 = vmatpush1.xpose.msra.mxu0 %v932
          %938 = vmatprep.subr.mxu0 0.0
          %939 = vmatpush1.xpose.msra.mxu0 %v933
          %940 = vmatprep.subr.mxu0 0.0
          %941 = vmatpush1.xpose.msra.mxu0 %v934
          %942 = vmatprep.subr.mxu0 0.0
          %943 = vmatpush1.xpose.msra.mxu0 %v935
          %944 = vmatprep.subr.mxu0 0.0
          %945 = vmatpush1.xpose.msra.mxu0 0.0
          %946 = vmatprep.subr.mxu0 0.0
          %947 = vmatpush1.xpose.msra.mxu0 0.0
          %948 = vmatprep.subr.mxu0 0.0
          %949 = vmatpush1.xpose.msra.mxu0 0.0
          %950 = vmatprep.subr.mxu0 0.0
          %951 = vmatpush1.xpose.msra.mxu0 0.0
          %952 = vmatprep.subr.mxu0 0.0
          %953 = vmatpush1.xpose.msra.mxu0 0.0
          %954 = vmatprep.subr.mxu0 0.0
          %955 = vmatpush1.xpose.msra.mxu0 0.0
          %956 = vmatprep.subr.mxu0 0.0
          %957 = vmatpush1.xpose.msra.mxu0 0.0
          %958 = vmatprep.subr.mxu0 0.0
          %959 = vmatpush1.xpose.msra.mxu0 0.0
          %960 = vmatprep.subr.mxu0 0.0
          %961 = vmatpush1.xpose.msra.mxu0 0.0
          %962 = vmatprep.subr.mxu0 0.0
          %963 = vmatpush1.xpose.msra.mxu0 0.0
          %964 = vmatprep.subr.mxu0 0.0
          %965 = vmatpush1.xpose.msra.mxu0 0.0
          %966 = vmatprep.subr.mxu0 0.0
          %967 = vmatpush1.xpose.msra.mxu0 0.0
          %968 = vmatprep.subr.mxu0 0.0
          %969 = vmatpush1.xpose.msra.mxu0 0.0
          %970 = vmatprep.subr.mxu0 0.0
          %971 = vmatpush1.xpose.msra.mxu0 0.0
          %972 = vmatprep.subr.mxu0 0.0
          %973 = vmatpush1.xpose.msra.mxu0 0.0
          %974 = vmatprep.subr.mxu0 0.0
          %975 = vmatpush1.xpose.msra.mxu0 0.0
          %976 = vmatprep.subr.mxu0 0.0
          %977 = vmatpush1.xpose.msra.mxu0 0.0
          %978 = vmatprep.subr.mxu0 0.0
          %979 = vmatpush1.xpose.msra.mxu0 0.0
          %980 = vmatprep.subr.mxu0 0.0
          %981 = vmatpush1.xpose.msra.mxu0 0.0
          %982 = vmatprep.subr.mxu0 0.0
          %983 = vmatpush1.xpose.msra.mxu0 0.0
          %984 = vmatprep.subr.mxu0 0.0
          %985 = vmatpush1.xpose.msra.mxu0 0.0
          %986 = vmatprep.subr.mxu0 0.0
          %987 = vmatpush1.xpose.msra.mxu0 0.0
          %988 = vmatprep.subr.mxu0 0.0
          %989 = vmatpush1.xpose.msra.mxu0 0.0
          %990 = vmatprep.subr.mxu0 0.0
          %991 = vmatpush1.xpose.msra.mxu0 0.0
          %992 = vmatprep.subr.mxu0 0.0
          %993 = vmatpush1.xpose.msra.mxu0 0.0
          %994 = vmatprep.subr.mxu0 0.0
          %995 = vmatpush1.xpose.msra.mxu0 0.0
          %996 = vmatprep.subr.mxu0 0.0
          %997 = vmatpush1.xpose.msra.mxu0 0.0
          %998 = vmatprep.subr.mxu0 0.0
          %999 = vmatpush1.xpose.msra.mxu0 0.0
          %1000 = vmatprep.mubr.f32.mxu0 0.0
          %1001 = vmatmul.mubr.f32.gmra.mrb[0].mxu0 %v236
          %v1002 = vpop.f32.mrb[0].mxu0
          %v1003 = vadd.f32 0.0, %v1002
          %v1004 = vpop.f32.mrb[0].mxu0
          %1005 = vdwg.mxu0
          %v1006 = vadd.f32 %v931, %v1003
          %1007 = vst.msk [vmem:[#allocation5] sm:$0x1] %vm929, %v1006
        $region52: #{tpu_custom_call.1} parent=35 // pred_fallthru
          _
        %p1008 = scmp.eq.s32.totalorder %s22, 2
        %p1009 = pnand %p1008, %p238
        %p1010 = pneg %p1009
        // Predicated region
        $region53: #{tpu_custom_call.1} parent=35 // pred_check
          _
        $region54: #{tpu_custom_call.1} parent=35 // pred_check_branch
          %1012 = sbr.rel (%p1009) target = $region56
        $region55: #{tpu_custom_call.1} parent=35 // pred_region
          %v1013 = vld [vmem:[#allocation4] sm:$0x1]
          %v1014 = vmul.f32 %v1013, 0.125
          %v1015 = vld [vmem:[#allocation5] sm:$0x1]
          %v1016 = vmul.f32 %v1015, 0.125
          %v1017 = vmul.f32 %v1014, %v1014
          %v1018 = vsub.f32 %v1016, %v1017
          %v1019 = vmax.f32 %v1018, 0.0
          %v1020 = vld [vmem:[%s3 + $0x2] sm:$0x1]
          %v1021 = vadd.f32 %v1019, 1e-05
          %v1022 = vrsqrt.pop %v1021
          %v1023 = vmul.f32 %v1020, %v1022
          %v1024 = vld [vmem:[%s3 + $0x3] sm:$0x1]
          %v1025 = vmul.f32 %v1014, %v1023
          %v1026 = vsub.f32 %v1024, %v1025
          %v1027 = vld [vmem:[%s3 + $0x4] sm:$0x1]
          %v1028 = vmul.f32 %v1027, %v1023
          %vm1029 = vcmask 253952
          %1030 = vst.msk [vmem:[#allocation8] sm:$0x1] %vm1029, %v1028
          %v1031 = vmul.f32 %v1027, %v1026
          %v1032 = vsel %vm1029, %v1031, 0.0
          %1033 = vadd.xlane.f32.xlu0 %v1032
          %v1034 = vpop.xlane.xlu0 %1033
          %v1035 = vld [vmem:[%s3 + $0x5] sm:$0x1]
          %v1036 = vadd.f32 %v1034, %v1035
          %vm1037 = vcmask 0
          %1038 = vst.msk [vmem:[#allocation9] sm:$0x1] %vm1037, %v1036
        $region56: #{tpu_custom_call.1} parent=35 // pred_fallthru
          _
        // Predicated region
        $region57: #{tpu_custom_call.1} parent=35 // pred_check
          %p1039 = pneg %p1008
        $region58: #{tpu_custom_call.1} parent=35 // pred_check_branch
          %1041 = sbr.rel (%p1039) target = $region60
        $region59: #{tpu_custom_call.1} parent=35 // pred_region
          %s1042 = smul.u32 %s23, 32
          %s1043 = scalar_lea.vmem [#allocation11], %s1042
          %v1044 = vld [vmem:[%s1043] sm:$0xff]
          %v1045 = vld [vmem:[%s1043 + $0x8] sm:$0xff]
          %v1046 = vld [vmem:[%s1043 + $0x10] sm:$0xff]
          %v1047 = vld [vmem:[%s1043 + $0x18] sm:$0xff]
          %v1048 = vld [vmem:[#allocation8] sm:$0x1]
          %v1049 = vld [vmem:[#allocation9] sm:$0x1]
          %1051 = vset.pattern.permute.xlu0 0
          %1052 = vperm.xlu0 %1051, %v1049
          %v1053 = vpop.permute.xlu0 %1052
          %v1055 = vlaneseq
          %v1056 = vshrl.u32 %v1055, 7
          %v1057 = vsub.s32 0, %v1056
          %v1058 = vrot.slane %v1053, %v1057
          %vm1059 = vcmask 261120
          %v1061 = vsel %vm1059, %v1048, 0
          %1063 = vmatprep.subr.mxu0 0.0
          %1064 = vmatpush1.msra.mxu0 %v1044
          %1065 = vmatprep.subr.mxu0 0.0
          %1066 = vmatpush1.msra.mxu0 %v1045
          %1067 = vmatprep.subr.mxu0 0.0
          %1068 = vmatpush1.msra.mxu0 %v1046
          %1069 = vmatprep.subr.mxu0 0.0
          %1070 = vmatpush1.msra.mxu0 %v1047
          %1071 = vmatprep.subr.mxu0 0.0
          %1072 = vmatpush1.msra.mxu0 0.0
          %1073 = vmatprep.subr.mxu0 0.0
          %1074 = vmatpush1.msra.mxu0 0.0
          %1075 = vmatprep.subr.mxu0 0.0
          %1076 = vmatpush1.msra.mxu0 0.0
          %1077 = vmatprep.subr.mxu0 0.0
          %1078 = vmatpush1.msra.mxu0 0.0
          %1079 = vmatprep.subr.mxu0 0.0
          %1080 = vmatpush1.msra.mxu0 0.0
          %1081 = vmatprep.subr.mxu0 0.0
          %1082 = vmatpush1.msra.mxu0 0.0
          %1083 = vmatprep.subr.mxu0 0.0
          %1084 = vmatpush1.msra.mxu0 0.0
          %1085 = vmatprep.subr.mxu0 0.0
          %1086 = vmatpush1.msra.mxu0 0.0
          %1087 = vmatprep.subr.mxu0 0.0
          %1088 = vmatpush1.msra.mxu0 0.0
          %1089 = vmatprep.subr.mxu0 0.0
          %1090 = vmatpush1.msra.mxu0 0.0
          %1091 = vmatprep.subr.mxu0 0.0
          %1092 = vmatpush1.msra.mxu0 0.0
          %1093 = vmatprep.subr.mxu0 0.0
          %1094 = vmatpush1.msra.mxu0 0.0
          %1095 = vmatprep.subr.mxu0 0.0
          %1096 = vmatpush1.msra.mxu0 0.0
          %1097 = vmatprep.subr.mxu0 0.0
          %1098 = vmatpush1.msra.mxu0 0.0
          %1099 = vmatprep.subr.mxu0 0.0
          %1100 = vmatpush1.msra.mxu0 0.0
          %1101 = vmatprep.subr.mxu0 0.0
          %1102 = vmatpush1.msra.mxu0 0.0
          %1103 = vmatprep.subr.mxu0 0.0
          %1104 = vmatpush1.msra.mxu0 0.0
          %1105 = vmatprep.subr.mxu0 0.0
          %1106 = vmatpush1.msra.mxu0 0.0
          %1107 = vmatprep.subr.mxu0 0.0
          %1108 = vmatpush1.msra.mxu0 0.0
          %1109 = vmatprep.subr.mxu0 0.0
          %1110 = vmatpush1.msra.mxu0 0.0
          %1111 = vmatprep.subr.mxu0 0.0
          %1112 = vmatpush1.msra.mxu0 0.0
          %1113 = vmatprep.subr.mxu0 0.0
          %1114 = vmatpush1.msra.mxu0 0.0
          %1115 = vmatprep.subr.mxu0 0.0
          %1116 = vmatpush1.msra.mxu0 0.0
          %1117 = vmatprep.subr.mxu0 0.0
          %1118 = vmatpush1.msra.mxu0 0.0
          %1119 = vmatprep.subr.mxu0 0.0
          %1120 = vmatpush1.msra.mxu0 0.0
          %1121 = vmatprep.subr.mxu0 0.0
          %1122 = vmatpush1.msra.mxu0 0.0
          %1123 = vmatprep.subr.mxu0 0.0
          %1124 = vmatpush1.msra.mxu0 0.0
          %1125 = vmatprep.subr.mxu0 0.0
          %1126 = vmatpush1.msra.mxu0 0.0
          %1127 = vmatprep.mubr.f32.mxu0 0.0
          %1128 = vmatmul.mubr.f32.gmra.mrb[0].mxu0 %v1061
          %v1129 = vpop.f32.mrb[0].mxu0
          %v1130 = vadd.f32 %v1058, %v1129
          %v1131 = vpop.f32.mrb[0].mxu0
          %1132 = vdwg.mxu0
          %1133 = vst [vmem:[%s216] sm:$0x1] %v1130
        $region60: #{tpu_custom_call.1} parent=35 // pred_fallthru
          _
        %s1134 = sand.u32 %s135, 1
        %s1135 = scalar_lea.sflag [#allocation13], %s1134
        %s1136 = sand.u32 %s135, 1
        %s1137 = scalar_lea.vmem [#allocation12], %s1136
        // Predicated region
        $region61: #{tpu_custom_call.1} parent=35 // pred_check
          %p1138 = pneg %p145
        $region62: #{tpu_custom_call.1} parent=35 // pred_check_branch
          %1140 = sbr.rel (%p1138) target = $region64
        $region63: #{tpu_custom_call.1} parent=35 // pred_region
          %p1141 = scmp.eq.s32.totalorder %s22, 2
          %s1142 = scalar_select %p1141, %s23, 0
          %s1144 = ssub.s32 16, 16
          %1145 = vsyncadd %s1135, %s1144
          %s1146 = smul.addr %s1142, 16
          %s1147 = scalar_lea.hbm %s4, %s1146
          %s1149 = sshll.u32 %s1137, 4
          %s1150 = int_to_ptr.vmem [resolvable:$true] %s1149
          %1152 = dma.vmem_to_hbm [thread:$0]  %s1150, 16, %s1147, %s1135
        $region64: #{tpu_custom_call.1} parent=35 // pred_fallthru
          _
      $region36: #{tpu_custom_call.1} parent=5 // pred_fallthru
        _
      %p1153 = scmp.le.s32.totalorder 2, %s13
      // Predicated region
      $region65: #{tpu_custom_call.1} parent=5 // pred_check
        %p1154 = pneg %p1153
      $region66: #{tpu_custom_call.1} parent=5 // pred_check_branch
        %1156 = sbr.rel (%p1154) target = $region68
      $region67: #{tpu_custom_call.1} parent=5 // pred_region
        %s1157 = ssub.s32 %s13, 2
        // Predicated region
        $region69: #{tpu_custom_call.1} parent=67 // pred_check
          %p1158 = pneg %p151
        $region70: #{tpu_custom_call.1} parent=67 // pred_check_branch
          %1160 = sbr.rel (%p1158) target = $region72
        $region71: #{tpu_custom_call.1} parent=67 // pred_region
          %s1161 = sand.u32 %s136, 1
          %s1162 = scalar_lea.sflag [#allocation13], %s1161
          %s1163 = sand.u32 %s136, 1
          %s1164 = scalar_lea.vmem [#allocation12], %s1163
          %1165 = dma.done %s1162, 16
        $region72: #{tpu_custom_call.1} parent=67 // pred_fallthru
          _
      $region68: #{tpu_custom_call.1} parent=5 // pred_fallthru
        _
    $region6: #{tpu_custom_call.1} parent=1 // loop_footer
      %s17 = sadd.s32 1, %s13
    $region7: #{tpu_custom_call.1} parent=1 // loop_footer_branch
      %12 = sbr.rel target = $region3
    $region8: #{tpu_custom_call.1} parent=1 // loop_exit
      _
    %1166 = vsyncpa [#allocation13], 1
    %s1167 = scalar_lea.sflag [#allocation13], 1
    %1168 = vsyncpa %s1167, 1

</llo_original>
